<compile_context>
chip_gen: v5e
topology: v5e:2x2
jax: 0.10.0
libtpu: 0.0.40
codegen_flags: <defaults>
</compile_context>

<pallas_src>
import functools
import math

import jax
import jax.numpy as jnp
import numpy as np
from jax import lax
from jax.experimental import pallas as pl
from jax.experimental.pallas import tpu as pltpu

_SUBLANES = 8
_LANES = 128
_MIN_TILE = _SUBLANES * _LANES  # 1024 batch columns per block


# ------------------------------- kernel ---------------------------------------

def _bi_tempered_kernel(logits_ref, labels_ref, out_ref, *,
                        t1, t2, smoothing, num_iters, n_valid, tile_cols):
    i = pl.program_id(0)
    a = logits_ref[...].astype(jnp.float32)   # (C, 8, L): batch on (sublane, lane)
    lab = labels_ref[...]                     # (8, L) int32 class ids
    c, sub, lanes = a.shape

    one_m_t1 = 1.0 - t1
    two_m_t1 = 2.0 - t1
    one_m_t2 = 1.0 - t2
    inv1mt1 = 1.0 / one_m_t1 if t1 != 1.0 else 0.0
    inv2mt1 = 1.0 / two_m_t1

    # t2 = 1.4 -> 1/(1-t2) = -2.5 -> exp_t(u, t2) = rsqrt(base)^5
    use_rsqrt = abs(t2 - 1.4) < 1e-9
    # probs^(1-t1) == rsqrt(base) exactly when (1-t1) == 0.5*(t2-1)  (t1=0.8, t2=1.4)
    reuse_r = use_rsqrt and abs(one_m_t1 - 0.5 * (t2 - 1.0)) < 1e-9

    def pow_m2p5(base):
        # base >= 1 by construction on this path (z0 <= 0, 1-t2 < 0, lp >= 1): no clamp.
        r = lax.rsqrt(base)
        r2 = r * r
        return (r2 * r2) * r, r              # base^(-2.5), base^(-0.5)

    def exp_t2_generic(base):
        return jnp.power(jnp.maximum(base, 0.0), 1.0 / one_m_t2)

    # --- tempered-softmax normalization: fixed-point iteration (t2 > 1) ---
    mu = jnp.max(a, axis=0)                   # (8, L)
    d = one_m_t2 * (a - mu)                   # hoisted once; d >= 0

    base = 1.0 + d                            # first iteration: z = z0  (s = 1)
    for _ in range(num_iters):
        if use_rsqrt:
            e, _ = pow_m2p5(base)
        else:
            e = exp_t2_generic(base)
        lp = jnp.sum(e, axis=0)               # (8, L) partition function, sublane-dense
        s = jnp.power(lp, one_m_t2)           # per-example power on a full vreg plane
        base = 1.0 + d * s
    if use_rsqrt:
        e, _ = pow_m2p5(base)
    else:
        e = exp_t2_generic(base)
    lp = jnp.sum(e, axis=0)

    # probs = exp_t(a - norm_const, t2) with the constant folded into the base:
    #   base_f = 1 + (1-t2)*(a - norm_const) = d + lp^(t2-1)   (>= 1 on the fast path)
    lp_pow = jnp.power(lp, t2 - 1.0)          # (8, L)
    base_f = d + lp_pow
    if use_rsqrt:
        probs, r = pow_m2p5(base_f)
    else:
        probs = exp_t2_generic(base_f)
        r = None

    # --- loss terms ---
    if smoothing > 0.0:
        on_val = 1.0 - smoothing
        off_val = smoothing / (c - 1)
    else:
        on_val, off_val = 1.0, 0.0

    def _log_t_py(u, t):
        return math.log(u) if t == 1.0 else (u ** (1.0 - t) - 1.0) / (1.0 - t)

    const_on = on_val * _log_t_py(on_val + 1e-10, t1) - (on_val ** two_m_t1) * inv2mt1
    const_off = off_val * _log_t_py(off_val + 1e-10, t1) - (off_val ** two_m_t1) * inv2mt1

    cls_ids = lax.broadcasted_iota(jnp.int32, (c, sub, lanes), 0)
    is_label = cls_ids == lab[None, :, :]

    if reuse_r:
        # loss = const - onehot*(r-1)/(1-t1) + probs*r/(2-t1)
        #      = A(onehot) + r * (probs/(2-t1) - B(onehot))
        a_on = const_on + on_val * inv1mt1
        a_off = const_off + off_val * inv1mt1
        b_on = on_val * inv1mt1
        b_off = off_val * inv1mt1
        a_sel = jnp.where(is_label, a_on, a_off)
        b_sel = jnp.where(is_label, b_on, b_off)
        loss = a_sel + r * (probs * inv2mt1 - b_sel)
    else:
        onehot = jnp.where(is_label, on_val, off_val)
        const_term = jnp.where(is_label, const_on, const_off)
        if t1 == 1.0:
            logt_probs = jnp.log(probs)
            probs_pow = probs
        else:
            logt_probs = (jnp.power(probs, one_m_t1) - 1.0) / one_m_t1
            probs_pow = jnp.power(probs, two_m_t1)
        loss = const_term - onehot * logt_probs + probs_pow * inv2mt1

    per_example = jnp.sum(loss, axis=0)       # (8, L) per-example loss

    # mask batch-padding columns on the per-example row (not the full tile)
    s_ids = lax.broadcasted_iota(jnp.int32, (sub, lanes), 0)
    l_ids = lax.broadcasted_iota(jnp.int32, (sub, lanes), 1)
    batch_idx = i * tile_cols + s_ids * lanes + l_ids
    per_example = jnp.where(batch_idx < n_valid, per_example, 0.0)

    out_ref[0, 0] = jnp.sum(per_example)      # independent per-block partial sum


# ------------------------------- wrapper ---------------------------------------

def _round_up(x, m):
    return ((x + m - 1) // m) * m


def bi_tempered_logistic_loss_pallas(logits, labels, *, t1=0.8, t2=1.4,
                                     smoothing=0.12, num_iters=5):
    """logits: [N, C]; labels: [N] int class ids. Returns the scalar mean loss."""
    if t2 <= 1.0:
        # TODO(synk): binary-search normalization (t2 < 1) / plain softmax (t2 == 1)
        # paths not implemented; the module's default uses t2 = 1.4 (fixed-point path).
        raise NotImplementedError("only the t2 > 1.0 fixed-point path is implemented")

    n, c = logits.shape

    # Batch-on-lanes layout presented as (C, num_blocks*8, L): each grid block is a
    # (C, 8, L) tile covering 8*L consecutive batch columns (sublane-dense per-example
    # plane).  Tile sized by total block bytes (~1 MiB of f32 logits), min 1024 cols.
    tl = ((1 << 20) // (c * 4)) // _MIN_TILE * _MIN_TILE
    tl = max(_MIN_TILE, tl)
    tl = min(tl, _round_up(n, _MIN_TILE))
    lanes = tl // _SUBLANES                   # multiple of 128
    n_pad = _round_up(n, tl)
    num_blocks = n_pad // tl

    # TODO(synk): this transpose+pad is an extra HBM pass outside the kernel; for
    # C >= 128 a classes-on-lanes layout (no transpose) would avoid it.
    logits_t = jnp.pad(jnp.transpose(logits), ((0, 0), (0, n_pad - n)))
    logits_t = logits_t.reshape(c, n_pad // lanes, lanes)
    labels_t = jnp.pad(labels.astype(jnp.int32), ((0, n_pad - n),))
    labels_t = labels_t.reshape(n_pad // lanes, lanes)

    kernel = functools.partial(
        _bi_tempered_kernel, t1=float(t1), t2=float(t2), smoothing=float(smoothing),
        num_iters=int(num_iters), n_valid=int(n), tile_cols=int(tl))

    # TODO(synk): for very large C, add a class-chunk grid axis (online max + two-pass
    # partition sum) instead of loading all classes in one block.
    partials = pl.pallas_call(
        kernel,
        out_shape=jax.ShapeDtypeStruct((num_blocks, 1), jnp.float32),
        grid=(num_blocks,),
        in_specs=[
            pl.BlockSpec((c, _SUBLANES, lanes), lambda i: (0, i, 0)),  # logits tile
            pl.BlockSpec((_SUBLANES, lanes), lambda i: (i, 0)),        # labels tile
        ],
        out_specs=pl.BlockSpec((1, 1), lambda i: (i, 0),
                               memory_space=pltpu.MemorySpace.SMEM),
        compiler_params=pltpu.CompilerParams(
            dimension_semantics=("parallel",),
            vmem_limit_bytes=32 * 1024 * 1024),
    )(logits_t, labels_t)

    # tiny final reduction (pairwise) + global mean in the wrapper
    return jnp.sum(partials) * (1.0 / float(n))


# --------------------------- pure-JAX reference --------------------------------

def _log_t(u, t):
    return (jnp.power(u, 1.0 - t) - 1.0) / (1.0 - t)


def _exp_t(u, t):
    return jnp.power(jnp.maximum(1.0 + (1.0 - t) * u, 0.0), 1.0 / (1.0 - t))


def _reference_loss(logits, labels, t1=0.8, t2=1.4, smoothing=0.12, num_iters=5):
    n, c = logits.shape
    onehot = jax.nn.one_hot(labels, c, dtype=jnp.float32)
    if smoothing > 0:
        onehot = (1.0 - smoothing * c / (c - 1)) * onehot + smoothing / (c - 1)
    mu = jnp.max(logits, -1, keepdims=True)
    z0 = logits - mu
    z = z0
    for _ in range(num_iters):
        lp = jnp.sum(_exp_t(z, t2), -1, keepdims=True)
        z = z0 * jnp.power(lp, 1.0 - t2)
    lp = jnp.sum(_exp_t(z, t2), -1, keepdims=True)
    norm_const = -_log_t(1.0 / lp, t2) + mu
    probs = _exp_t(logits - norm_const, t2)
    loss = (onehot * _log_t(onehot + 1e-10, t1)
            - onehot * _log_t(probs, t1)
            - jnp.power(onehot, 2.0 - t1) / (2.0 - t1)
            + jnp.power(probs, 2.0 - t1) / (2.0 - t1))
    return jnp.mean(jnp.sum(loss, -1))


# ---------------------------------- main ---------------------------------------

if __name__ == "__main__":
    key = jax.random.PRNGKey(0)
    k_logits, k_labels = jax.random.split(key)

    N, C = 8, 16  # small: batch=8, num_classes=16
    logits = jax.random.normal(k_logits, (N, C), dtype=jnp.float32) * 3.0
    labels = jax.random.randint(k_labels, (N,), 0, C, dtype=jnp.int32)

    loss = bi_tempered_logistic_loss_pallas(logits, labels)
    loss = jax.block_until_ready(loss)

    ref = jax.block_until_ready(_reference_loss(logits, labels))
    assert np.allclose(np.asarray(loss), np.asarray(ref), rtol=2e-4, atol=2e-5), (
        f"mismatch: pallas={loss} ref={ref}")

    print("KERNEL_OK")
</pallas_src>

<mosaic_0001>
module attributes {stable_mosaic.version = 11 : i64} {
  func.func @_bi_tempered_kernel(%arg0: i32, %arg1: memref<16x8x128xf32, #tpu.memory_space<vmem>>, %arg2: memref<8x128xi32, #tpu.memory_space<vmem>>, %arg3: memref<1x1xf32, #tpu.memory_space<smem>>) attributes {dimension_semantics = [#tpu.dimension_semantics<parallel>], iteration_bounds = array<i64: 1>, scalar_prefetch = 0 : i64, scratch_operands = 0 : i64, tpu.core_type = #tpu.core_type<tc>, window_params = [{transform_indices = @transform_0, window_bounds = array<i64: 16, 8, 128>}, {transform_indices = @transform_1, window_bounds = array<i64: 8, 128>}, {transform_indices = @transform_2, window_bounds = array<i64: 1, 1>}]} {
    %c0 = arith.constant 0 : index
    %c0_0 = arith.constant 0 : index
    %c0_1 = arith.constant 0 : index
    %0 = vector.load %arg1[%c0, %c0_0, %c0_1] : memref<16x8x128xf32, #tpu.memory_space<vmem>>, vector<16x8x128xf32>
    %c0_2 = arith.constant 0 : index
    %c0_3 = arith.constant 0 : index
    %1 = vector.load %arg2[%c0_2, %c0_3] : memref<8x128xi32, #tpu.memory_space<vmem>>, vector<8x128xi32>
    %cst = arith.constant dense<0xFF800000> : vector<8x128xf32>
    %2 = vector.multi_reduction <maximumf>, %0, %cst [0] : vector<16x8x128xf32> to vector<8x128xf32>
    %3 = vector.shape_cast %2 : vector<8x128xf32> to vector<1x8x128xf32>
    %4 = vector.broadcast %3 : vector<1x8x128xf32> to vector<16x8x128xf32>
    %5 = arith.subf %0, %4 : vector<16x8x128xf32>
    %cst_4 = arith.constant -4.000000e-01 : f32
    %6 = vector.broadcast %cst_4 : f32 to vector<16x8x128xf32>
    %7 = arith.mulf %6, %5 : vector<16x8x128xf32>
    %cst_5 = arith.constant 1.000000e+00 : f32
    %8 = vector.broadcast %cst_5 : f32 to vector<16x8x128xf32>
    %9 = arith.addf %8, %7 : vector<16x8x128xf32>
    %10 = math.rsqrt %9 : vector<16x8x128xf32>
    %11 = arith.mulf %10, %10 : vector<16x8x128xf32>
    %12 = arith.mulf %11, %11 : vector<16x8x128xf32>
    %13 = arith.mulf %12, %10 : vector<16x8x128xf32>
    %cst_6 = arith.constant dense<0.000000e+00> : vector<8x128xf32>
    %14 = vector.multi_reduction <add>, %13, %cst_6 [0] : vector<16x8x128xf32> to vector<8x128xf32>
    %cst_7 = arith.constant -4.000000e-01 : f32
    %15 = vector.broadcast %cst_7 : f32 to vector<8x128xf32>
    %16 = math.powf %14, %15 : vector<8x128xf32>
    %17 = vector.shape_cast %16 : vector<8x128xf32> to vector<1x8x128xf32>
    %18 = vector.broadcast %17 : vector<1x8x128xf32> to vector<16x8x128xf32>
    %19 = arith.mulf %7, %18 : vector<16x8x128xf32>
    %cst_8 = arith.constant 1.000000e+00 : f32
    %20 = vector.broadcast %cst_8 : f32 to vector<16x8x128xf32>
    %21 = arith.addf %20, %19 : vector<16x8x128xf32>
    %22 = math.rsqrt %21 : vector<16x8x128xf32>
    %23 = arith.mulf %22, %22 : vector<16x8x128xf32>
    %24 = arith.mulf %23, %23 : vector<16x8x128xf32>
    %25 = arith.mulf %24, %22 : vector<16x8x128xf32>
    %cst_9 = arith.constant dense<0.000000e+00> : vector<8x128xf32>
    %26 = vector.multi_reduction <add>, %25, %cst_9 [0] : vector<16x8x128xf32> to vector<8x128xf32>
    %cst_10 = arith.constant -4.000000e-01 : f32
    %27 = vector.broadcast %cst_10 : f32 to vector<8x128xf32>
    %28 = math.powf %26, %27 : vector<8x128xf32>
    %29 = vector.shape_cast %28 : vector<8x128xf32> to vector<1x8x128xf32>
    %30 = vector.broadcast %29 : vector<1x8x128xf32> to vector<16x8x128xf32>
    %31 = arith.mulf %7, %30 : vector<16x8x128xf32>
    %cst_11 = arith.constant 1.000000e+00 : f32
    %32 = vector.broadcast %cst_11 : f32 to vector<16x8x128xf32>
    %33 = arith.addf %32, %31 : vector<16x8x128xf32>
    %34 = math.rsqrt %33 : vector<16x8x128xf32>
    %35 = arith.mulf %34, %34 : vector<16x8x128xf32>
    %36 = arith.mulf %35, %35 : vector<16x8x128xf32>
    %37 = arith.mulf %36, %34 : vector<16x8x128xf32>
    %cst_12 = arith.constant dense<0.000000e+00> : vector<8x128xf32>
    %38 = vector.multi_reduction <add>, %37, %cst_12 [0] : vector<16x8x128xf32> to vector<8x128xf32>
    %cst_13 = arith.constant -4.000000e-01 : f32
    %39 = vector.broadcast %cst_13 : f32 to vector<8x128xf32>
    %40 = math.powf %38, %39 : vector<8x128xf32>
    %41 = vector.shape_cast %40 : vector<8x128xf32> to vector<1x8x128xf32>
    %42 = vector.broadcast %41 : vector<1x8x128xf32> to vector<16x8x128xf32>
    %43 = arith.mulf %7, %42 : vector<16x8x128xf32>
    %cst_14 = arith.constant 1.000000e+00 : f32
    %44 = vector.broadcast %cst_14 : f32 to vector<16x8x128xf32>
    %45 = arith.addf %44, %43 : vector<16x8x128xf32>
    %46 = math.rsqrt %45 : vector<16x8x128xf32>
    %47 = arith.mulf %46, %46 : vector<16x8x128xf32>
    %48 = arith.mulf %47, %47 : vector<16x8x128xf32>
    %49 = arith.mulf %48, %46 : vector<16x8x128xf32>
    %cst_15 = arith.constant dense<0.000000e+00> : vector<8x128xf32>
    %50 = vector.multi_reduction <add>, %49, %cst_15 [0] : vector<16x8x128xf32> to vector<8x128xf32>
    %cst_16 = arith.constant -4.000000e-01 : f32
    %51 = vector.broadcast %cst_16 : f32 to vector<8x128xf32>
    %52 = math.powf %50, %51 : vector<8x128xf32>
    %53 = vector.shape_cast %52 : vector<8x128xf32> to vector<1x8x128xf32>
    %54 = vector.broadcast %53 : vector<1x8x128xf32> to vector<16x8x128xf32>
    %55 = arith.mulf %7, %54 : vector<16x8x128xf32>
    %cst_17 = arith.constant 1.000000e+00 : f32
    %56 = vector.broadcast %cst_17 : f32 to vector<16x8x128xf32>
    %57 = arith.addf %56, %55 : vector<16x8x128xf32>
    %58 = math.rsqrt %57 : vector<16x8x128xf32>
    %59 = arith.mulf %58, %58 : vector<16x8x128xf32>
    %60 = arith.mulf %59, %59 : vector<16x8x128xf32>
    %61 = arith.mulf %60, %58 : vector<16x8x128xf32>
    %cst_18 = arith.constant dense<0.000000e+00> : vector<8x128xf32>
    %62 = vector.multi_reduction <add>, %61, %cst_18 [0] : vector<16x8x128xf32> to vector<8x128xf32>
    %cst_19 = arith.constant -4.000000e-01 : f32
    %63 = vector.broadcast %cst_19 : f32 to vector<8x128xf32>
    %64 = math.powf %62, %63 : vector<8x128xf32>
    %65 = vector.shape_cast %64 : vector<8x128xf32> to vector<1x8x128xf32>
    %66 = vector.broadcast %65 : vector<1x8x128xf32> to vector<16x8x128xf32>
    %67 = arith.mulf %7, %66 : vector<16x8x128xf32>
    %cst_20 = arith.constant 1.000000e+00 : f32
    %68 = vector.broadcast %cst_20 : f32 to vector<16x8x128xf32>
    %69 = arith.addf %68, %67 : vector<16x8x128xf32>
    %70 = math.rsqrt %69 : vector<16x8x128xf32>
    %71 = arith.mulf %70, %70 : vector<16x8x128xf32>
    %72 = arith.mulf %71, %71 : vector<16x8x128xf32>
    %73 = arith.mulf %72, %70 : vector<16x8x128xf32>
    %cst_21 = arith.constant dense<0.000000e+00> : vector<8x128xf32>
    %74 = vector.multi_reduction <add>, %73, %cst_21 [0] : vector<16x8x128xf32> to vector<8x128xf32>
    %cst_22 = arith.constant 4.000000e-01 : f32
    %75 = vector.broadcast %cst_22 : f32 to vector<8x128xf32>
    %76 = math.powf %74, %75 : vector<8x128xf32>
    %77 = vector.shape_cast %76 : vector<8x128xf32> to vector<1x8x128xf32>
    %78 = vector.broadcast %77 : vector<1x8x128xf32> to vector<16x8x128xf32>
    %79 = arith.addf %7, %78 : vector<16x8x128xf32>
    %80 = math.rsqrt %79 : vector<16x8x128xf32>
    %81 = arith.mulf %80, %80 : vector<16x8x128xf32>
    %82 = arith.mulf %81, %81 : vector<16x8x128xf32>
    %83 = arith.mulf %82, %80 : vector<16x8x128xf32>
    %84 = tpu.iota {dimensions = array<i32: 0>} : vector<16x8x128xi32>
    %85 = vector.shape_cast %1 : vector<8x128xi32> to vector<1x8x128xi32>
    %86 = vector.broadcast %85 : vector<1x8x128xi32> to vector<16x8x128xi32>
    %87 = arith.cmpi eq, %84, %86 : vector<16x8x128xi32>
    %cst_23 = arith.constant 3.57411051 : f32
    %cst_24 = arith.constant 0.0126910266 : f32
    %88 = vector.broadcast %cst_23 : f32 to vector<16x8x128xf32>
    %89 = vector.broadcast %cst_24 : f32 to vector<16x8x128xf32>
    %90 = arith.select %87, %88, %89 : vector<16x8x128xi1>, vector<16x8x128xf32>
    %cst_25 = arith.constant 4.400000e+00 : f32
    %cst_26 = arith.constant 4.000000e-02 : f32
    %91 = vector.broadcast %cst_25 : f32 to vector<16x8x128xf32>
    %92 = vector.broadcast %cst_26 : f32 to vector<16x8x128xf32>
    %93 = arith.select %87, %91, %92 : vector<16x8x128xi1>, vector<16x8x128xf32>
    %cst_27 = arith.constant 0.833333313 : f32
    %94 = vector.broadcast %cst_27 : f32 to vector<16x8x128xf32>
    %95 = arith.mulf %83, %94 : vector<16x8x128xf32>
    %96 = arith.subf %95, %93 : vector<16x8x128xf32>
    %97 = arith.mulf %80, %96 : vector<16x8x128xf32>
    %98 = arith.addf %90, %97 : vector<16x8x128xf32>
    %cst_28 = arith.constant dense<0.000000e+00> : vector<8x128xf32>
    %99 = vector.multi_reduction <add>, %98, %cst_28 [0] : vector<16x8x128xf32> to vector<8x128xf32>
    %100 = tpu.iota {dimensions = array<i32: 0>} : vector<8x128xi32>
    %101 = tpu.iota {dimensions = array<i32: 1>} : vector<8x128xi32>
    %c1024_i32 = arith.constant 1024 : i32
    %102 = arith.muli %arg0, %c1024_i32 : i32
    %c128_i32 = arith.constant 128 : i32
    %103 = vector.broadcast %c128_i32 : i32 to vector<8x128xi32>
    %104 = arith.muli %100, %103 : vector<8x128xi32>
    %105 = vector.broadcast %102 : i32 to vector<8x128xi32>
    %106 = arith.addi %105, %104 : vector<8x128xi32>
    %107 = arith.addi %106, %101 : vector<8x128xi32>
    %c8_i32 = arith.constant 8 : i32
    %108 = vector.broadcast %c8_i32 : i32 to vector<8x128xi32>
    %109 = arith.cmpi slt, %107, %108 : vector<8x128xi32>
    %cst_29 = arith.constant 0.000000e+00 : f32
    %110 = vector.broadcast %cst_29 : f32 to vector<8x128xf32>
    %111 = arith.select %109, %99, %110 : vector<8x128xi1>, vector<8x128xf32>
    %112 = vector.shape_cast %111 : vector<8x128xf32> to vector<1x8x128xf32>
    %cst_30 = arith.constant dense<0.000000e+00> : vector<1xf32>
    %113 = vector.multi_reduction <add>, %112, %cst_30 [1, 2] : vector<1x8x128xf32> to vector<1xf32>
    %114 = vector.shape_cast %113 : vector<1xf32> to vector<1x1x1xf32>
    %115 = vector.extract %114[0, 0, 0] : f32 from vector<1x1x1xf32>
    %c0_31 = arith.constant 0 : index
    %c0_32 = arith.constant 0 : index
    %116 = memref.load %arg3[%c0_31, %c0_32] : memref<1x1xf32, #tpu.memory_space<smem>>
    memref.store %115, %arg3[%c0_31, %c0_32] : memref<1x1xf32, #tpu.memory_space<smem>>
    return
  }
  func.func @transform_0(%arg0: i32) -> (i32, i32, i32) {
    %c0_i32 = arith.constant 0 : i32
    %c0_i32_0 = arith.constant 0 : i32
    %c0_i32_1 = arith.constant 0 : i32
    return %c0_i32, %arg0, %c0_i32_0 : i32, i32, i32
  }
  func.func @transform_1(%arg0: i32) -> (i32, i32) {
    %c0_i32 = arith.constant 0 : i32
    %c0_i32_0 = arith.constant 0 : i32
    return %arg0, %c0_i32 : i32, i32
  }
  func.func @transform_2(%arg0: i32) -> (i32, i32) {
    %c0_i32 = arith.constant 0 : i32
    %c0_i32_0 = arith.constant 0 : i32
    return %arg0, %c0_i32 : i32, i32
  }
}

</mosaic_0001>

<llo_original>
// kernel: tpu_custom_call.1
$region0: #{tpu_custom_call.1}
  #allocation0 [shape = 'u32[]', space=smem, size = 0x4, offset = 0x4, fixed_abs, tag = 'smem constant byte address 0x4 - core index']
  #allocation1 [shape = 'u32[72,128]{1,0:T(1,128)}', space=vmem, size = 0x9000, scoped, tag = 'internal scratch']
  %s0 = inlined_call_operand.hbm [shape: f32[16,8,128], index: 0, kind: input, shape index: {}]
  %s1 = inlined_call_operand.hbm [shape: s32[8,128], index: 1, kind: input, shape index: {}]
  %s2 = inlined_call_operand.hbm [shape: f32[1,1], index: 2, kind: output, shape index: {}]
  %s3 = sld [smem:[#allocation0]]
  $region26: #{tpu_custom_call.1} parent=0
    _
  %s5 = ssub.s32 1, %s3
  %s6 = scalar_select 0, %s5, %s3
  $region1: #{tpu_custom_call.1} parent=0
    #allocation2 [shape = 'u8[65536]{0}', space=vmem, size = 0x10000, scoped, tag = 'input window, operand 0, single buffered']
    #allocation3 [shape = 's32[1]{0}', space=sflag, size = 0x4, scoped, tag = 'scoped memory for tpu_custom_call.1']
    #allocation4 [shape = 's32[1]{0}', space=sflag, size = 0x4, scoped, tag = 'scoped memory for tpu_custom_call.1']
    #allocation5 [shape = 'u8[4096]{0}', space=vmem, size = 0x1000, scoped, tag = 'input window, operand 1, single buffered']
    #allocation6 [shape = 's32[1]{0}', space=sflag, size = 0x4, scoped, tag = 'scoped memory for tpu_custom_call.1']
    #allocation7 [shape = 'u8[512]{0}', space=smem, size = 0x200, scoped, tag = 'output window, operand 0, single buffered']
    %7 = vsyncpa [#allocation3], 0
    %8 = vsyncpa [#allocation6], 0
    %9 = vsyncpa [#allocation4], 0
    // Predicated region
    $region2: #{tpu_custom_call.1} parent=1 // pred_check
      _
    $region3: #{tpu_custom_call.1} parent=1 // pred_check_branch
      %11 = sbr.rel (0) target = $region5
    $region4: #{tpu_custom_call.1} parent=1 // pred_region
      %13 = vsyncadd [#allocation3], 0
      %s14 = sshll.u32 %s0, 4
      %s15 = int_to_ptr.hbm [resolvable:$true] %s14
      %s16 = sshll.u32 [#allocation2], 4
      %s17 = int_to_ptr.vmem [resolvable:$true] %s16
      %22 = dma.hbm_to_vmem [thread:$0]  %s15, 2048, %s17, [#allocation3], 128, 128, 8
    $region5: #{tpu_custom_call.1} parent=1 // pred_fallthru
      _
    // Predicated region
    $region6: #{tpu_custom_call.1} parent=1 // pred_check
      _
    $region7: #{tpu_custom_call.1} parent=1 // pred_check_branch
      %24 = sbr.rel (0) target = $region9
    $region8: #{tpu_custom_call.1} parent=1 // pred_region
      %26 = vsyncadd [#allocation6], 0
      %s28 = sshll.u32 %s1, 4
      %s29 = int_to_ptr.hbm [resolvable:$true] %s28
      %s30 = sshll.u32 [#allocation5], 4
      %s31 = int_to_ptr.vmem [resolvable:$true] %s30
      %33 = dma.hbm_to_vmem [thread:$0]  %s29, 128, %s31, [#allocation6]
    $region9: #{tpu_custom_call.1} parent=1 // pred_fallthru
      _
    // Predicated region
    $region10: #{tpu_custom_call.1} parent=1 // pred_check
      _
    $region11: #{tpu_custom_call.1} parent=1 // pred_check_branch
      %35 = sbr.rel (0) target = $region13
    $region12: #{tpu_custom_call.1} parent=1 // pred_region
      %37 = dma.done [#allocation3], 2048
    $region13: #{tpu_custom_call.1} parent=1 // pred_fallthru
      _
    // Predicated region
    $region14: #{tpu_custom_call.1} parent=1 // pred_check
      _
    $region15: #{tpu_custom_call.1} parent=1 // pred_check_branch
      %39 = sbr.rel (0) target = $region17
    $region16: #{tpu_custom_call.1} parent=1 // pred_region
      %41 = dma.done [#allocation6], 128
    $region17: #{tpu_custom_call.1} parent=1 // pred_fallthru
      _
    %v42 = vld [vmem:[#allocation2] sm:$0xff]
    %v43 = vld [vmem:[#allocation2 + $0x8] sm:$0xff]
    %v44 = vld [vmem:[#allocation2 + $0x10] sm:$0xff]
    %v45 = vld [vmem:[#allocation2 + $0x18] sm:$0xff]
    %v46 = vld [vmem:[#allocation2 + $0x20] sm:$0xff]
    %v47 = vld [vmem:[#allocation2 + $0x28] sm:$0xff]
    %v48 = vld [vmem:[#allocation2 + $0x30] sm:$0xff]
    %v49 = vld [vmem:[#allocation2 + $0x38] sm:$0xff]
    %v50 = vld [vmem:[#allocation2 + $0x40] sm:$0xff]
    %v51 = vld [vmem:[#allocation2 + $0x48] sm:$0xff]
    %v52 = vld [vmem:[#allocation2 + $0x50] sm:$0xff]
    %v53 = vld [vmem:[#allocation2 + $0x58] sm:$0xff]
    %v54 = vld [vmem:[#allocation2 + $0x60] sm:$0xff]
    %v55 = vld [vmem:[#allocation2 + $0x68] sm:$0xff]
    %v56 = vld [vmem:[#allocation2 + $0x70] sm:$0xff]
    %v57 = vld [vmem:[#allocation2 + $0x78] sm:$0xff]
    %v58 = vld [vmem:[#allocation5] sm:$0xff]
    %v59 = vmax.f32 %v42, %v46
    %v60 = vmax.f32 %v43, %v47
    %v61 = vmax.f32 %v44, %v48
    %v62 = vmax.f32 %v45, %v49
    %v63 = vmax.f32 %v59, %v50
    %v64 = vmax.f32 %v60, %v51
    %v65 = vmax.f32 %v61, %v52
    %v66 = vmax.f32 %v62, %v53
    %v67 = vmax.f32 %v63, %v54
    %v68 = vmax.f32 %v64, %v55
    %v69 = vmax.f32 %v65, %v56
    %v70 = vmax.f32 %v66, %v57
    %v71 = vmax.f32 %v67, %v68
    %v72 = vmax.f32 %v69, %v70
    %v73 = vmax.f32 %v71, %v72
    %v74 = vsub.f32 %v42, %v73
    %v75 = vsub.f32 %v43, %v73
    %v76 = vsub.f32 %v44, %v73
    %v77 = vsub.f32 %v45, %v73
    %v78 = vsub.f32 %v46, %v73
    %v79 = vsub.f32 %v47, %v73
    %v80 = vsub.f32 %v48, %v73
    %v81 = vsub.f32 %v49, %v73
    %v82 = vsub.f32 %v50, %v73
    %v83 = vsub.f32 %v51, %v73
    %v84 = vsub.f32 %v52, %v73
    %v85 = vsub.f32 %v53, %v73
    %v86 = vsub.f32 %v54, %v73
    %v87 = vsub.f32 %v55, %v73
    %v88 = vsub.f32 %v56, %v73
    %v89 = vsub.f32 %v57, %v73
    %v90 = vmul.f32 %v74, -0.4
    %v91 = vmul.f32 %v75, -0.4
    %v92 = vmul.f32 %v76, -0.4
    %v93 = vmul.f32 %v77, -0.4
    %v94 = vmul.f32 %v78, -0.4
    %v95 = vmul.f32 %v79, -0.4
    %v96 = vmul.f32 %v80, -0.4
    %v97 = vmul.f32 %v81, -0.4
    %v98 = vmul.f32 %v82, -0.4
    %v99 = vmul.f32 %v83, -0.4
    %v100 = vmul.f32 %v84, -0.4
    %v101 = vmul.f32 %v85, -0.4
    %v102 = vmul.f32 %v86, -0.4
    %v103 = vmul.f32 %v87, -0.4
    %v104 = vmul.f32 %v88, -0.4
    %v105 = vmul.f32 %v89, -0.4
    %v106 = vadd.f32 %v90, 1.0
    %v107 = vadd.f32 %v91, 1.0
    %v108 = vadd.f32 %v92, 1.0
    %v109 = vadd.f32 %v93, 1.0
    %v110 = vadd.f32 %v94, 1.0
    %v111 = vadd.f32 %v95, 1.0
    %v112 = vadd.f32 %v96, 1.0
    %v113 = vadd.f32 %v97, 1.0
    %v114 = vadd.f32 %v98, 1.0
    %v115 = vadd.f32 %v99, 1.0
    %v116 = vadd.f32 %v100, 1.0
    %v117 = vadd.f32 %v101, 1.0
    %v118 = vadd.f32 %v102, 1.0
    %v119 = vadd.f32 %v103, 1.0
    %v120 = vadd.f32 %v104, 1.0
    %v121 = vadd.f32 %v105, 1.0
    %v122 = vrsqrt.pop %v106
    %v123 = vmul.f32 %v122, %v106
    %v124 = vmul.f32 %v123, %v122
    %v125 = vmul.f32 0.5, %v124
    %v126 = vsub.f32 1.5, %v125
    %v127 = vmul.f32 %v122, %v126
    %vm128 = vweird.f32 %v106
    %vm129 = vweird.f32 %v122
    %vm130 = vmor %vm128, %vm129
    %v131 = vsel %vm130, %v122, %v127
    %v132 = vrsqrt.pop %v107
    %v133 = vmul.f32 %v132, %v107
    %v134 = vmul.f32 %v133, %v132
    %v135 = vmul.f32 0.5, %v134
    %v136 = vsub.f32 1.5, %v135
    %v137 = vmul.f32 %v132, %v136
    %vm138 = vweird.f32 %v107
    %vm139 = vweird.f32 %v132
    %vm140 = vmor %vm138, %vm139
    %v141 = vsel %vm140, %v132, %v137
    %v142 = vrsqrt.pop %v108
    %v143 = vmul.f32 %v142, %v108
    %v144 = vmul.f32 %v143, %v142
    %v145 = vmul.f32 0.5, %v144
    %v146 = vsub.f32 1.5, %v145
    %v147 = vmul.f32 %v142, %v146
    %vm148 = vweird.f32 %v108
    %vm149 = vweird.f32 %v142
    %vm150 = vmor %vm148, %vm149
    %v151 = vsel %vm150, %v142, %v147
    %v152 = vrsqrt.pop %v109
    %v153 = vmul.f32 %v152, %v109
    %v154 = vmul.f32 %v153, %v152
    %v155 = vmul.f32 0.5, %v154
    %v156 = vsub.f32 1.5, %v155
    %v157 = vmul.f32 %v152, %v156
    %vm158 = vweird.f32 %v109
    %vm159 = vweird.f32 %v152
    %vm160 = vmor %vm158, %vm159
    %v161 = vsel %vm160, %v152, %v157
    %v162 = vrsqrt.pop %v110
    %v163 = vmul.f32 %v162, %v110
    %v164 = vmul.f32 %v163, %v162
    %v165 = vmul.f32 0.5, %v164
    %v166 = vsub.f32 1.5, %v165
    %v167 = vmul.f32 %v162, %v166
    %vm168 = vweird.f32 %v110
    %vm169 = vweird.f32 %v162
    %vm170 = vmor %vm168, %vm169
    %v171 = vsel %vm170, %v162, %v167
    %v172 = vrsqrt.pop %v111
    %v173 = vmul.f32 %v172, %v111
    %v174 = vmul.f32 %v173, %v172
    %v175 = vmul.f32 0.5, %v174
    %v176 = vsub.f32 1.5, %v175
    %v177 = vmul.f32 %v172, %v176
    %vm178 = vweird.f32 %v111
    %vm179 = vweird.f32 %v172
    %vm180 = vmor %vm178, %vm179
    %v181 = vsel %vm180, %v172, %v177
    %v182 = vrsqrt.pop %v112
    %v183 = vmul.f32 %v182, %v112
    %v184 = vmul.f32 %v183, %v182
    %v185 = vmul.f32 0.5, %v184
    %v186 = vsub.f32 1.5, %v185
    %v187 = vmul.f32 %v182, %v186
    %vm188 = vweird.f32 %v112
    %vm189 = vweird.f32 %v182
    %vm190 = vmor %vm188, %vm189
    %v191 = vsel %vm190, %v182, %v187
    %v192 = vrsqrt.pop %v113
    %v193 = vmul.f32 %v192, %v113
    %v194 = vmul.f32 %v193, %v192
    %v195 = vmul.f32 0.5, %v194
    %v196 = vsub.f32 1.5, %v195
    %v197 = vmul.f32 %v192, %v196
    %vm198 = vweird.f32 %v113
    %vm199 = vweird.f32 %v192
    %vm200 = vmor %vm198, %vm199
    %v201 = vsel %vm200, %v192, %v197
    %v202 = vrsqrt.pop %v114
    %v203 = vmul.f32 %v202, %v114
    %v204 = vmul.f32 %v203, %v202
    %v205 = vmul.f32 0.5, %v204
    %v206 = vsub.f32 1.5, %v205
    %v207 = vmul.f32 %v202, %v206
    %vm208 = vweird.f32 %v114
    %vm209 = vweird.f32 %v202
    %vm210 = vmor %vm208, %vm209
    %v211 = vsel %vm210, %v202, %v207
    %v212 = vrsqrt.pop %v115
    %v213 = vmul.f32 %v212, %v115
    %v214 = vmul.f32 %v213, %v212
    %v215 = vmul.f32 0.5, %v214
    %v216 = vsub.f32 1.5, %v215
    %v217 = vmul.f32 %v212, %v216
    %vm218 = vweird.f32 %v115
    %vm219 = vweird.f32 %v212
    %vm220 = vmor %vm218, %vm219
    %v221 = vsel %vm220, %v212, %v217
    %v222 = vrsqrt.pop %v116
    %v223 = vmul.f32 %v222, %v116
    %v224 = vmul.f32 %v223, %v222
    %v225 = vmul.f32 0.5, %v224
    %v226 = vsub.f32 1.5, %v225
    %v227 = vmul.f32 %v222, %v226
    %vm228 = vweird.f32 %v116
    %vm229 = vweird.f32 %v222
    %vm230 = vmor %vm228, %vm229
    %v231 = vsel %vm230, %v222, %v227
    %v232 = vrsqrt.pop %v117
    %v233 = vmul.f32 %v232, %v117
    %v234 = vmul.f32 %v233, %v232
    %v235 = vmul.f32 0.5, %v234
    %v236 = vsub.f32 1.5, %v235
    %v237 = vmul.f32 %v232, %v236
    %vm238 = vweird.f32 %v117
    %vm239 = vweird.f32 %v232
    %vm240 = vmor %vm238, %vm239
    %v241 = vsel %vm240, %v232, %v237
    %v242 = vrsqrt.pop %v118
    %v243 = vmul.f32 %v242, %v118
    %v244 = vmul.f32 %v243, %v242
    %v245 = vmul.f32 0.5, %v244
    %v246 = vsub.f32 1.5, %v245
    %v247 = vmul.f32 %v242, %v246
    %vm248 = vweird.f32 %v118
    %vm249 = vweird.f32 %v242
    %vm250 = vmor %vm248, %vm249
    %v251 = vsel %vm250, %v242, %v247
    %v252 = vrsqrt.pop %v119
    %v253 = vmul.f32 %v252, %v119
    %v254 = vmul.f32 %v253, %v252
    %v255 = vmul.f32 0.5, %v254
    %v256 = vsub.f32 1.5, %v255
    %v257 = vmul.f32 %v252, %v256
    %vm258 = vweird.f32 %v119
    %vm259 = vweird.f32 %v252
    %vm260 = vmor %vm258, %vm259
    %v261 = vsel %vm260, %v252, %v257
    %v262 = vrsqrt.pop %v120
    %v263 = vmul.f32 %v262, %v120
    %v264 = vmul.f32 %v263, %v262
    %v265 = vmul.f32 0.5, %v264
    %v266 = vsub.f32 1.5, %v265
    %v267 = vmul.f32 %v262, %v266
    %vm268 = vweird.f32 %v120
    %vm269 = vweird.f32 %v262
    %vm270 = vmor %vm268, %vm269
    %v271 = vsel %vm270, %v262, %v267
    %v272 = vrsqrt.pop %v121
    %v273 = vmul.f32 %v272, %v121
    %v274 = vmul.f32 %v273, %v272
    %v275 = vmul.f32 0.5, %v274
    %v276 = vsub.f32 1.5, %v275
    %v277 = vmul.f32 %v272, %v276
    %vm278 = vweird.f32 %v121
    %vm279 = vweird.f32 %v272
    %vm280 = vmor %vm278, %vm279
    %v281 = vsel %vm280, %v272, %v277
    %v282 = vmul.f32 %v131, %v131
    %v283 = vmul.f32 %v141, %v141
    %v284 = vmul.f32 %v151, %v151
    %v285 = vmul.f32 %v161, %v161
    %v286 = vmul.f32 %v171, %v171
    %v287 = vmul.f32 %v181, %v181
    %v288 = vmul.f32 %v191, %v191
    %v289 = vmul.f32 %v201, %v201
    %v290 = vmul.f32 %v211, %v211
    %v291 = vmul.f32 %v221, %v221
    %v292 = vmul.f32 %v231, %v231
    %v293 = vmul.f32 %v241, %v241
    %v294 = vmul.f32 %v251, %v251
    %v295 = vmul.f32 %v261, %v261
    %v296 = vmul.f32 %v271, %v271
    %v297 = vmul.f32 %v281, %v281
    %v298 = vmul.f32 %v282, %v282
    %v299 = vmul.f32 %v283, %v283
    %v300 = vmul.f32 %v284, %v284
    %v301 = vmul.f32 %v285, %v285
    %v302 = vmul.f32 %v286, %v286
    %v303 = vmul.f32 %v287, %v287
    %v304 = vmul.f32 %v288, %v288
    %v305 = vmul.f32 %v289, %v289
    %v306 = vmul.f32 %v290, %v290
    %v307 = vmul.f32 %v291, %v291
    %v308 = vmul.f32 %v292, %v292
    %v309 = vmul.f32 %v293, %v293
    %v310 = vmul.f32 %v294, %v294
    %v311 = vmul.f32 %v295, %v295
    %v312 = vmul.f32 %v296, %v296
    %v313 = vmul.f32 %v297, %v297
    %v314 = vmul.f32 %v298, %v131
    %v315 = vmul.f32 %v299, %v141
    %v316 = vmul.f32 %v300, %v151
    %v317 = vmul.f32 %v301, %v161
    %v318 = vmul.f32 %v302, %v171
    %v319 = vmul.f32 %v303, %v181
    %v320 = vmul.f32 %v304, %v191
    %v321 = vmul.f32 %v305, %v201
    %v322 = vmul.f32 %v306, %v211
    %v323 = vmul.f32 %v307, %v221
    %v324 = vmul.f32 %v308, %v231
    %v325 = vmul.f32 %v309, %v241
    %v326 = vmul.f32 %v310, %v251
    %v327 = vmul.f32 %v311, %v261
    %v328 = vmul.f32 %v312, %v271
    %v329 = vmul.f32 %v313, %v281
    %v330 = vadd.f32 %v314, %v315
    %v331 = vadd.f32 %v330, %v316
    %v332 = vadd.f32 %v331, %v317
    %v333 = vadd.f32 %v332, %v318
    %v334 = vadd.f32 %v333, %v319
    %v335 = vadd.f32 %v334, %v320
    %v336 = vadd.f32 %v335, %v321
    %v337 = vadd.f32 %v336, %v322
    %v338 = vadd.f32 %v337, %v323
    %v339 = vadd.f32 %v338, %v324
    %v340 = vadd.f32 %v339, %v325
    %v341 = vadd.f32 %v340, %v326
    %v342 = vadd.f32 %v341, %v327
    %v343 = vadd.f32 %v342, %v328
    %v344 = vadd.f32 %v343, %v329
    %v345 = vpow.f32 %v344, -0.4
    %v346 = vmul.f32 %v90, %v345
    %v347 = vmul.f32 %v91, %v345
    %v348 = vmul.f32 %v92, %v345
    %v349 = vmul.f32 %v93, %v345
    %v350 = vmul.f32 %v94, %v345
    %v351 = vmul.f32 %v95, %v345
    %v352 = vmul.f32 %v96, %v345
    %v353 = vmul.f32 %v97, %v345
    %v354 = vmul.f32 %v98, %v345
    %v355 = vmul.f32 %v99, %v345
    %v356 = vmul.f32 %v100, %v345
    %v357 = vmul.f32 %v101, %v345
    %v358 = vmul.f32 %v102, %v345
    %v359 = vmul.f32 %v103, %v345
    %v360 = vmul.f32 %v104, %v345
    %v361 = vmul.f32 %v105, %v345
    %v362 = vadd.f32 %v346, 1.0
    %v363 = vadd.f32 %v347, 1.0
    %v364 = vadd.f32 %v348, 1.0
    %v365 = vadd.f32 %v349, 1.0
    %v366 = vadd.f32 %v350, 1.0
    %v367 = vadd.f32 %v351, 1.0
    %v368 = vadd.f32 %v352, 1.0
    %v369 = vadd.f32 %v353, 1.0
    %v370 = vadd.f32 %v354, 1.0
    %v371 = vadd.f32 %v355, 1.0
    %v372 = vadd.f32 %v356, 1.0
    %v373 = vadd.f32 %v357, 1.0
    %v374 = vadd.f32 %v358, 1.0
    %v375 = vadd.f32 %v359, 1.0
    %v376 = vadd.f32 %v360, 1.0
    %v377 = vadd.f32 %v361, 1.0
    %v378 = vrsqrt.pop %v362
    %v379 = vmul.f32 %v378, %v362
    %v380 = vmul.f32 %v379, %v378
    %v381 = vmul.f32 0.5, %v380
    %v382 = vsub.f32 1.5, %v381
    %v383 = vmul.f32 %v378, %v382
    %vm384 = vweird.f32 %v362
    %vm385 = vweird.f32 %v378
    %vm386 = vmor %vm384, %vm385
    %v387 = vsel %vm386, %v378, %v383
    %v388 = vrsqrt.pop %v363
    %v389 = vmul.f32 %v388, %v363
    %v390 = vmul.f32 %v389, %v388
    %v391 = vmul.f32 0.5, %v390
    %v392 = vsub.f32 1.5, %v391
    %v393 = vmul.f32 %v388, %v392
    %vm394 = vweird.f32 %v363
    %vm395 = vweird.f32 %v388
    %vm396 = vmor %vm394, %vm395
    %v397 = vsel %vm396, %v388, %v393
    %v398 = vrsqrt.pop %v364
    %v399 = vmul.f32 %v398, %v364
    %v400 = vmul.f32 %v399, %v398
    %v401 = vmul.f32 0.5, %v400
    %v402 = vsub.f32 1.5, %v401
    %v403 = vmul.f32 %v398, %v402
    %vm404 = vweird.f32 %v364
    %vm405 = vweird.f32 %v398
    %vm406 = vmor %vm404, %vm405
    %v407 = vsel %vm406, %v398, %v403
    %v408 = vrsqrt.pop %v365
    %v409 = vmul.f32 %v408, %v365
    %v410 = vmul.f32 %v409, %v408
    %v411 = vmul.f32 0.5, %v410
    %v412 = vsub.f32 1.5, %v411
    %v413 = vmul.f32 %v408, %v412
    %vm414 = vweird.f32 %v365
    %vm415 = vweird.f32 %v408
    %vm416 = vmor %vm414, %vm415
    %v417 = vsel %vm416, %v408, %v413
    %v418 = vrsqrt.pop %v366
    %v419 = vmul.f32 %v418, %v366
    %v420 = vmul.f32 %v419, %v418
    %v421 = vmul.f32 0.5, %v420
    %v422 = vsub.f32 1.5, %v421
    %v423 = vmul.f32 %v418, %v422
    %vm424 = vweird.f32 %v366
    %vm425 = vweird.f32 %v418
    %vm426 = vmor %vm424, %vm425
    %v427 = vsel %vm426, %v418, %v423
    %v428 = vrsqrt.pop %v367
    %v429 = vmul.f32 %v428, %v367
    %v430 = vmul.f32 %v429, %v428
    %v431 = vmul.f32 0.5, %v430
    %v432 = vsub.f32 1.5, %v431
    %v433 = vmul.f32 %v428, %v432
    %vm434 = vweird.f32 %v367
    %vm435 = vweird.f32 %v428
    %vm436 = vmor %vm434, %vm435
    %v437 = vsel %vm436, %v428, %v433
    %v438 = vrsqrt.pop %v368
    %v439 = vmul.f32 %v438, %v368
    %v440 = vmul.f32 %v439, %v438
    %v441 = vmul.f32 0.5, %v440
    %v442 = vsub.f32 1.5, %v441
    %v443 = vmul.f32 %v438, %v442
    %vm444 = vweird.f32 %v368
    %vm445 = vweird.f32 %v438
    %vm446 = vmor %vm444, %vm445
    %v447 = vsel %vm446, %v438, %v443
    %v448 = vrsqrt.pop %v369
    %v449 = vmul.f32 %v448, %v369
    %v450 = vmul.f32 %v449, %v448
    %v451 = vmul.f32 0.5, %v450
    %v452 = vsub.f32 1.5, %v451
    %v453 = vmul.f32 %v448, %v452
    %vm454 = vweird.f32 %v369
    %vm455 = vweird.f32 %v448
    %vm456 = vmor %vm454, %vm455
    %v457 = vsel %vm456, %v448, %v453
    %v458 = vrsqrt.pop %v370
    %v459 = vmul.f32 %v458, %v370
    %v460 = vmul.f32 %v459, %v458
    %v461 = vmul.f32 0.5, %v460
    %v462 = vsub.f32 1.5, %v461
    %v463 = vmul.f32 %v458, %v462
    %vm464 = vweird.f32 %v370
    %vm465 = vweird.f32 %v458
    %vm466 = vmor %vm464, %vm465
    %v467 = vsel %vm466, %v458, %v463
    %v468 = vrsqrt.pop %v371
    %v469 = vmul.f32 %v468, %v371
    %v470 = vmul.f32 %v469, %v468
    %v471 = vmul.f32 0.5, %v470
    %v472 = vsub.f32 1.5, %v471
    %v473 = vmul.f32 %v468, %v472
    %vm474 = vweird.f32 %v371
    %vm475 = vweird.f32 %v468
    %vm476 = vmor %vm474, %vm475
    %v477 = vsel %vm476, %v468, %v473
    %v478 = vrsqrt.pop %v372
    %v479 = vmul.f32 %v478, %v372
    %v480 = vmul.f32 %v479, %v478
    %v481 = vmul.f32 0.5, %v480
    %v482 = vsub.f32 1.5, %v481
    %v483 = vmul.f32 %v478, %v482
    %vm484 = vweird.f32 %v372
    %vm485 = vweird.f32 %v478
    %vm486 = vmor %vm484, %vm485
    %v487 = vsel %vm486, %v478, %v483
    %v488 = vrsqrt.pop %v373
    %v489 = vmul.f32 %v488, %v373
    %v490 = vmul.f32 %v489, %v488
    %v491 = vmul.f32 0.5, %v490
    %v492 = vsub.f32 1.5, %v491
    %v493 = vmul.f32 %v488, %v492
    %vm494 = vweird.f32 %v373
    %vm495 = vweird.f32 %v488
    %vm496 = vmor %vm494, %vm495
    %v497 = vsel %vm496, %v488, %v493
    %v498 = vrsqrt.pop %v374
    %v499 = vmul.f32 %v498, %v374
    %v500 = vmul.f32 %v499, %v498
    %v501 = vmul.f32 0.5, %v500
    %v502 = vsub.f32 1.5, %v501
    %v503 = vmul.f32 %v498, %v502
    %vm504 = vweird.f32 %v374
    %vm505 = vweird.f32 %v498
    %vm506 = vmor %vm504, %vm505
    %v507 = vsel %vm506, %v498, %v503
    %v508 = vrsqrt.pop %v375
    %v509 = vmul.f32 %v508, %v375
    %v510 = vmul.f32 %v509, %v508
    %v511 = vmul.f32 0.5, %v510
    %v512 = vsub.f32 1.5, %v511
    %v513 = vmul.f32 %v508, %v512
    %vm514 = vweird.f32 %v375
    %vm515 = vweird.f32 %v508
    %vm516 = vmor %vm514, %vm515
    %v517 = vsel %vm516, %v508, %v513
    %v518 = vrsqrt.pop %v376
    %v519 = vmul.f32 %v518, %v376
    %v520 = vmul.f32 %v519, %v518
    %v521 = vmul.f32 0.5, %v520
    %v522 = vsub.f32 1.5, %v521
    %v523 = vmul.f32 %v518, %v522
    %vm524 = vweird.f32 %v376
    %vm525 = vweird.f32 %v518
    %vm526 = vmor %vm524, %vm525
    %v527 = vsel %vm526, %v518, %v523
    %v528 = vrsqrt.pop %v377
    %v529 = vmul.f32 %v528, %v377
    %v530 = vmul.f32 %v529, %v528
    %v531 = vmul.f32 0.5, %v530
    %v532 = vsub.f32 1.5, %v531
    %v533 = vmul.f32 %v528, %v532
    %vm534 = vweird.f32 %v377
    %vm535 = vweird.f32 %v528
    %vm536 = vmor %vm534, %vm535
    %v537 = vsel %vm536, %v528, %v533
    %v538 = vmul.f32 %v387, %v387
    %v539 = vmul.f32 %v397, %v397
    %v540 = vmul.f32 %v407, %v407
    %v541 = vmul.f32 %v417, %v417
    %v542 = vmul.f32 %v427, %v427
    %v543 = vmul.f32 %v437, %v437
    %v544 = vmul.f32 %v447, %v447
    %v545 = vmul.f32 %v457, %v457
    %v546 = vmul.f32 %v467, %v467
    %v547 = vmul.f32 %v477, %v477
    %v548 = vmul.f32 %v487, %v487
    %v549 = vmul.f32 %v497, %v497
    %v550 = vmul.f32 %v507, %v507
    %v551 = vmul.f32 %v517, %v517
    %v552 = vmul.f32 %v527, %v527
    %v553 = vmul.f32 %v537, %v537
    %v554 = vmul.f32 %v538, %v538
    %v555 = vmul.f32 %v539, %v539
    %v556 = vmul.f32 %v540, %v540
    %v557 = vmul.f32 %v541, %v541
    %v558 = vmul.f32 %v542, %v542
    %v559 = vmul.f32 %v543, %v543
    %v560 = vmul.f32 %v544, %v544
    %v561 = vmul.f32 %v545, %v545
    %v562 = vmul.f32 %v546, %v546
    %v563 = vmul.f32 %v547, %v547
    %v564 = vmul.f32 %v548, %v548
    %v565 = vmul.f32 %v549, %v549
    %v566 = vmul.f32 %v550, %v550
    %v567 = vmul.f32 %v551, %v551
    %v568 = vmul.f32 %v552, %v552
    %v569 = vmul.f32 %v553, %v553
    %v570 = vmul.f32 %v554, %v387
    %v571 = vmul.f32 %v555, %v397
    %v572 = vmul.f32 %v556, %v407
    %v573 = vmul.f32 %v557, %v417
    %v574 = vmul.f32 %v558, %v427
    %v575 = vmul.f32 %v559, %v437
    %v576 = vmul.f32 %v560, %v447
    %v577 = vmul.f32 %v561, %v457
    %v578 = vmul.f32 %v562, %v467
    %v579 = vmul.f32 %v563, %v477
    %v580 = vmul.f32 %v564, %v487
    %v581 = vmul.f32 %v565, %v497
    %v582 = vmul.f32 %v566, %v507
    %v583 = vmul.f32 %v567, %v517
    %v584 = vmul.f32 %v568, %v527
    %v585 = vmul.f32 %v569, %v537
    %v586 = vadd.f32 %v570, %v571
    %v587 = vadd.f32 %v586, %v572
    %v588 = vadd.f32 %v587, %v573
    %v589 = vadd.f32 %v588, %v574
    %v590 = vadd.f32 %v589, %v575
    %v591 = vadd.f32 %v590, %v576
    %v592 = vadd.f32 %v591, %v577
    %v593 = vadd.f32 %v592, %v578
    %v594 = vadd.f32 %v593, %v579
    %v595 = vadd.f32 %v594, %v580
    %v596 = vadd.f32 %v595, %v581
    %v597 = vadd.f32 %v596, %v582
    %v598 = vadd.f32 %v597, %v583
    %v599 = vadd.f32 %v598, %v584
    %v600 = vadd.f32 %v599, %v585
    %v601 = vpow.f32 %v600, -0.4
    %v602 = vmul.f32 %v90, %v601
    %v603 = vmul.f32 %v91, %v601
    %v604 = vmul.f32 %v92, %v601
    %v605 = vmul.f32 %v93, %v601
    %v606 = vmul.f32 %v94, %v601
    %v607 = vmul.f32 %v95, %v601
    %v608 = vmul.f32 %v96, %v601
    %v609 = vmul.f32 %v97, %v601
    %v610 = vmul.f32 %v98, %v601
    %v611 = vmul.f32 %v99, %v601
    %v612 = vmul.f32 %v100, %v601
    %v613 = vmul.f32 %v101, %v601
    %v614 = vmul.f32 %v102, %v601
    %v615 = vmul.f32 %v103, %v601
    %v616 = vmul.f32 %v104, %v601
    %v617 = vmul.f32 %v105, %v601
    %v618 = vadd.f32 %v602, 1.0
    %v619 = vadd.f32 %v603, 1.0
    %v620 = vadd.f32 %v604, 1.0
    %v621 = vadd.f32 %v605, 1.0
    %v622 = vadd.f32 %v606, 1.0
    %v623 = vadd.f32 %v607, 1.0
    %v624 = vadd.f32 %v608, 1.0
    %v625 = vadd.f32 %v609, 1.0
    %v626 = vadd.f32 %v610, 1.0
    %v627 = vadd.f32 %v611, 1.0
    %v628 = vadd.f32 %v612, 1.0
    %v629 = vadd.f32 %v613, 1.0
    %v630 = vadd.f32 %v614, 1.0
    %v631 = vadd.f32 %v615, 1.0
    %v632 = vadd.f32 %v616, 1.0
    %v633 = vadd.f32 %v617, 1.0
    %v634 = vrsqrt.pop %v618
    %v635 = vmul.f32 %v634, %v618
    %v636 = vmul.f32 %v635, %v634
    %v637 = vmul.f32 0.5, %v636
    %v638 = vsub.f32 1.5, %v637
    %v639 = vmul.f32 %v634, %v638
    %vm640 = vweird.f32 %v618
    %vm641 = vweird.f32 %v634
    %vm642 = vmor %vm640, %vm641
    %v643 = vsel %vm642, %v634, %v639
    %v644 = vrsqrt.pop %v619
    %v645 = vmul.f32 %v644, %v619
    %v646 = vmul.f32 %v645, %v644
    %v647 = vmul.f32 0.5, %v646
    %v648 = vsub.f32 1.5, %v647
    %v649 = vmul.f32 %v644, %v648
    %vm650 = vweird.f32 %v619
    %vm651 = vweird.f32 %v644
    %vm652 = vmor %vm650, %vm651
    %v653 = vsel %vm652, %v644, %v649
    %v654 = vrsqrt.pop %v620
    %v655 = vmul.f32 %v654, %v620
    %v656 = vmul.f32 %v655, %v654
    %v657 = vmul.f32 0.5, %v656
    %v658 = vsub.f32 1.5, %v657
    %v659 = vmul.f32 %v654, %v658
    %vm660 = vweird.f32 %v620
    %vm661 = vweird.f32 %v654
    %vm662 = vmor %vm660, %vm661
    %v663 = vsel %vm662, %v654, %v659
    %v664 = vrsqrt.pop %v621
    %v665 = vmul.f32 %v664, %v621
    %v666 = vmul.f32 %v665, %v664
    %v667 = vmul.f32 0.5, %v666
    %v668 = vsub.f32 1.5, %v667
    %v669 = vmul.f32 %v664, %v668
    %vm670 = vweird.f32 %v621
    %vm671 = vweird.f32 %v664
    %vm672 = vmor %vm670, %vm671
    %v673 = vsel %vm672, %v664, %v669
    %v674 = vrsqrt.pop %v622
    %v675 = vmul.f32 %v674, %v622
    %v676 = vmul.f32 %v675, %v674
    %v677 = vmul.f32 0.5, %v676
    %v678 = vsub.f32 1.5, %v677
    %v679 = vmul.f32 %v674, %v678
    %vm680 = vweird.f32 %v622
    %vm681 = vweird.f32 %v674
    %vm682 = vmor %vm680, %vm681
    %v683 = vsel %vm682, %v674, %v679
    %v684 = vrsqrt.pop %v623
    %v685 = vmul.f32 %v684, %v623
    %v686 = vmul.f32 %v685, %v684
    %v687 = vmul.f32 0.5, %v686
    %v688 = vsub.f32 1.5, %v687
    %v689 = vmul.f32 %v684, %v688
    %vm690 = vweird.f32 %v623
    %vm691 = vweird.f32 %v684
    %vm692 = vmor %vm690, %vm691
    %v693 = vsel %vm692, %v684, %v689
    %v694 = vrsqrt.pop %v624
    %v695 = vmul.f32 %v694, %v624
    %v696 = vmul.f32 %v695, %v694
    %v697 = vmul.f32 0.5, %v696
    %v698 = vsub.f32 1.5, %v697
    %v699 = vmul.f32 %v694, %v698
    %vm700 = vweird.f32 %v624
    %vm701 = vweird.f32 %v694
    %vm702 = vmor %vm700, %vm701
    %v703 = vsel %vm702, %v694, %v699
    %v704 = vrsqrt.pop %v625
    %v705 = vmul.f32 %v704, %v625
    %v706 = vmul.f32 %v705, %v704
    %v707 = vmul.f32 0.5, %v706
    %v708 = vsub.f32 1.5, %v707
    %v709 = vmul.f32 %v704, %v708
    %vm710 = vweird.f32 %v625
    %vm711 = vweird.f32 %v704
    %vm712 = vmor %vm710, %vm711
    %v713 = vsel %vm712, %v704, %v709
    %v714 = vrsqrt.pop %v626
    %v715 = vmul.f32 %v714, %v626
    %v716 = vmul.f32 %v715, %v714
    %v717 = vmul.f32 0.5, %v716
    %v718 = vsub.f32 1.5, %v717
    %v719 = vmul.f32 %v714, %v718
    %vm720 = vweird.f32 %v626
    %vm721 = vweird.f32 %v714
    %vm722 = vmor %vm720, %vm721
    %v723 = vsel %vm722, %v714, %v719
    %v724 = vrsqrt.pop %v627
    %v725 = vmul.f32 %v724, %v627
    %v726 = vmul.f32 %v725, %v724
    %v727 = vmul.f32 0.5, %v726
    %v728 = vsub.f32 1.5, %v727
    %v729 = vmul.f32 %v724, %v728
    %vm730 = vweird.f32 %v627
    %vm731 = vweird.f32 %v724
    %vm732 = vmor %vm730, %vm731
    %v733 = vsel %vm732, %v724, %v729
    %v734 = vrsqrt.pop %v628
    %v735 = vmul.f32 %v734, %v628
    %v736 = vmul.f32 %v735, %v734
    %v737 = vmul.f32 0.5, %v736
    %v738 = vsub.f32 1.5, %v737
    %v739 = vmul.f32 %v734, %v738
    %vm740 = vweird.f32 %v628
    %vm741 = vweird.f32 %v734
    %vm742 = vmor %vm740, %vm741
    %v743 = vsel %vm742, %v734, %v739
    %v744 = vrsqrt.pop %v629
    %v745 = vmul.f32 %v744, %v629
    %v746 = vmul.f32 %v745, %v744
    %v747 = vmul.f32 0.5, %v746
    %v748 = vsub.f32 1.5, %v747
    %v749 = vmul.f32 %v744, %v748
    %vm750 = vweird.f32 %v629
    %vm751 = vweird.f32 %v744
    %vm752 = vmor %vm750, %vm751
    %v753 = vsel %vm752, %v744, %v749
    %v754 = vrsqrt.pop %v630
    %v755 = vmul.f32 %v754, %v630
    %v756 = vmul.f32 %v755, %v754
    %v757 = vmul.f32 0.5, %v756
    %v758 = vsub.f32 1.5, %v757
    %v759 = vmul.f32 %v754, %v758
    %vm760 = vweird.f32 %v630
    %vm761 = vweird.f32 %v754
    %vm762 = vmor %vm760, %vm761
    %v763 = vsel %vm762, %v754, %v759
    %v764 = vrsqrt.pop %v631
    %v765 = vmul.f32 %v764, %v631
    %v766 = vmul.f32 %v765, %v764
    %v767 = vmul.f32 0.5, %v766
    %v768 = vsub.f32 1.5, %v767
    %v769 = vmul.f32 %v764, %v768
    %vm770 = vweird.f32 %v631
    %vm771 = vweird.f32 %v764
    %vm772 = vmor %vm770, %vm771
    %v773 = vsel %vm772, %v764, %v769
    %v774 = vrsqrt.pop %v632
    %v775 = vmul.f32 %v774, %v632
    %v776 = vmul.f32 %v775, %v774
    %v777 = vmul.f32 0.5, %v776
    %v778 = vsub.f32 1.5, %v777
    %v779 = vmul.f32 %v774, %v778
    %vm780 = vweird.f32 %v632
    %vm781 = vweird.f32 %v774
    %vm782 = vmor %vm780, %vm781
    %v783 = vsel %vm782, %v774, %v779
    %v784 = vrsqrt.pop %v633
    %v785 = vmul.f32 %v784, %v633
    %v786 = vmul.f32 %v785, %v784
    %v787 = vmul.f32 0.5, %v786
    %v788 = vsub.f32 1.5, %v787
    %v789 = vmul.f32 %v784, %v788
    %vm790 = vweird.f32 %v633
    %vm791 = vweird.f32 %v784
    %vm792 = vmor %vm790, %vm791
    %v793 = vsel %vm792, %v784, %v789
    %v794 = vmul.f32 %v643, %v643
    %v795 = vmul.f32 %v653, %v653
    %v796 = vmul.f32 %v663, %v663
    %v797 = vmul.f32 %v673, %v673
    %v798 = vmul.f32 %v683, %v683
    %v799 = vmul.f32 %v693, %v693
    %v800 = vmul.f32 %v703, %v703
    %v801 = vmul.f32 %v713, %v713
    %v802 = vmul.f32 %v723, %v723
    %v803 = vmul.f32 %v733, %v733
    %v804 = vmul.f32 %v743, %v743
    %v805 = vmul.f32 %v753, %v753
    %v806 = vmul.f32 %v763, %v763
    %v807 = vmul.f32 %v773, %v773
    %v808 = vmul.f32 %v783, %v783
    %v809 = vmul.f32 %v793, %v793
    %v810 = vmul.f32 %v794, %v794
    %v811 = vmul.f32 %v795, %v795
    %v812 = vmul.f32 %v796, %v796
    %v813 = vmul.f32 %v797, %v797
    %v814 = vmul.f32 %v798, %v798
    %v815 = vmul.f32 %v799, %v799
    %v816 = vmul.f32 %v800, %v800
    %v817 = vmul.f32 %v801, %v801
    %v818 = vmul.f32 %v802, %v802
    %v819 = vmul.f32 %v803, %v803
    %v820 = vmul.f32 %v804, %v804
    %v821 = vmul.f32 %v805, %v805
    %v822 = vmul.f32 %v806, %v806
    %v823 = vmul.f32 %v807, %v807
    %v824 = vmul.f32 %v808, %v808
    %v825 = vmul.f32 %v809, %v809
    %v826 = vmul.f32 %v810, %v643
    %v827 = vmul.f32 %v811, %v653
    %v828 = vmul.f32 %v812, %v663
    %v829 = vmul.f32 %v813, %v673
    %v830 = vmul.f32 %v814, %v683
    %v831 = vmul.f32 %v815, %v693
    %v832 = vmul.f32 %v816, %v703
    %v833 = vmul.f32 %v817, %v713
    %v834 = vmul.f32 %v818, %v723
    %v835 = vmul.f32 %v819, %v733
    %v836 = vmul.f32 %v820, %v743
    %v837 = vmul.f32 %v821, %v753
    %v838 = vmul.f32 %v822, %v763
    %v839 = vmul.f32 %v823, %v773
    %v840 = vmul.f32 %v824, %v783
    %v841 = vmul.f32 %v825, %v793
    %v842 = vadd.f32 %v826, %v827
    %v843 = vadd.f32 %v842, %v828
    %v844 = vadd.f32 %v843, %v829
    %v845 = vadd.f32 %v844, %v830
    %v846 = vadd.f32 %v845, %v831
    %v847 = vadd.f32 %v846, %v832
    %v848 = vadd.f32 %v847, %v833
    %v849 = vadd.f32 %v848, %v834
    %v850 = vadd.f32 %v849, %v835
    %v851 = vadd.f32 %v850, %v836
    %v852 = vadd.f32 %v851, %v837
    %v853 = vadd.f32 %v852, %v838
    %v854 = vadd.f32 %v853, %v839
    %v855 = vadd.f32 %v854, %v840
    %v856 = vadd.f32 %v855, %v841
    %v857 = vpow.f32 %v856, -0.4
    %v858 = vmul.f32 %v90, %v857
    %v859 = vmul.f32 %v91, %v857
    %v860 = vmul.f32 %v92, %v857
    %v861 = vmul.f32 %v93, %v857
    %v862 = vmul.f32 %v94, %v857
    %v863 = vmul.f32 %v95, %v857
    %v864 = vmul.f32 %v96, %v857
    %v865 = vmul.f32 %v97, %v857
    %v866 = vmul.f32 %v98, %v857
    %v867 = vmul.f32 %v99, %v857
    %v868 = vmul.f32 %v100, %v857
    %v869 = vmul.f32 %v101, %v857
    %v870 = vmul.f32 %v102, %v857
    %v871 = vmul.f32 %v103, %v857
    %v872 = vmul.f32 %v104, %v857
    %v873 = vmul.f32 %v105, %v857
    %v874 = vadd.f32 %v858, 1.0
    %v875 = vadd.f32 %v859, 1.0
    %v876 = vadd.f32 %v860, 1.0
    %v877 = vadd.f32 %v861, 1.0
    %v878 = vadd.f32 %v862, 1.0
    %v879 = vadd.f32 %v863, 1.0
    %v880 = vadd.f32 %v864, 1.0
    %v881 = vadd.f32 %v865, 1.0
    %v882 = vadd.f32 %v866, 1.0
    %v883 = vadd.f32 %v867, 1.0
    %v884 = vadd.f32 %v868, 1.0
    %v885 = vadd.f32 %v869, 1.0
    %v886 = vadd.f32 %v870, 1.0
    %v887 = vadd.f32 %v871, 1.0
    %v888 = vadd.f32 %v872, 1.0
    %v889 = vadd.f32 %v873, 1.0
    %v890 = vrsqrt.pop %v874
    %v891 = vmul.f32 %v890, %v874
    %v892 = vmul.f32 %v891, %v890
    %v893 = vmul.f32 0.5, %v892
    %v894 = vsub.f32 1.5, %v893
    %v895 = vmul.f32 %v890, %v894
    %vm896 = vweird.f32 %v874
    %vm897 = vweird.f32 %v890
    %vm898 = vmor %vm896, %vm897
    %v899 = vsel %vm898, %v890, %v895
    %v900 = vrsqrt.pop %v875
    %v901 = vmul.f32 %v900, %v875
    %v902 = vmul.f32 %v901, %v900
    %v903 = vmul.f32 0.5, %v902
    %v904 = vsub.f32 1.5, %v903
    %v905 = vmul.f32 %v900, %v904
    %vm906 = vweird.f32 %v875
    %vm907 = vweird.f32 %v900
    %vm908 = vmor %vm906, %vm907
    %v909 = vsel %vm908, %v900, %v905
    %v910 = vrsqrt.pop %v876
    %v911 = vmul.f32 %v910, %v876
    %v912 = vmul.f32 %v911, %v910
    %v913 = vmul.f32 0.5, %v912
    %v914 = vsub.f32 1.5, %v913
    %v915 = vmul.f32 %v910, %v914
    %vm916 = vweird.f32 %v876
    %vm917 = vweird.f32 %v910
    %vm918 = vmor %vm916, %vm917
    %v919 = vsel %vm918, %v910, %v915
    %v920 = vrsqrt.pop %v877
    %v921 = vmul.f32 %v920, %v877
    %v922 = vmul.f32 %v921, %v920
    %v923 = vmul.f32 0.5, %v922
    %v924 = vsub.f32 1.5, %v923
    %v925 = vmul.f32 %v920, %v924
    %vm926 = vweird.f32 %v877
    %vm927 = vweird.f32 %v920
    %vm928 = vmor %vm926, %vm927
    %v929 = vsel %vm928, %v920, %v925
    %v930 = vrsqrt.pop %v878
    %v931 = vmul.f32 %v930, %v878
    %v932 = vmul.f32 %v931, %v930
    %v933 = vmul.f32 0.5, %v932
    %v934 = vsub.f32 1.5, %v933
    %v935 = vmul.f32 %v930, %v934
    %vm936 = vweird.f32 %v878
    %vm937 = vweird.f32 %v930
    %vm938 = vmor %vm936, %vm937
    %v939 = vsel %vm938, %v930, %v935
    %v940 = vrsqrt.pop %v879
    %v941 = vmul.f32 %v940, %v879
    %v942 = vmul.f32 %v941, %v940
    %v943 = vmul.f32 0.5, %v942
    %v944 = vsub.f32 1.5, %v943
    %v945 = vmul.f32 %v940, %v944
    %vm946 = vweird.f32 %v879
    %vm947 = vweird.f32 %v940
    %vm948 = vmor %vm946, %vm947
    %v949 = vsel %vm948, %v940, %v945
    %v950 = vrsqrt.pop %v880
    %v951 = vmul.f32 %v950, %v880
    %v952 = vmul.f32 %v951, %v950
    %v953 = vmul.f32 0.5, %v952
    %v954 = vsub.f32 1.5, %v953
    %v955 = vmul.f32 %v950, %v954
    %vm956 = vweird.f32 %v880
    %vm957 = vweird.f32 %v950
    %vm958 = vmor %vm956, %vm957
    %v959 = vsel %vm958, %v950, %v955
    %v960 = vrsqrt.pop %v881
    %v961 = vmul.f32 %v960, %v881
    %v962 = vmul.f32 %v961, %v960
    %v963 = vmul.f32 0.5, %v962
    %v964 = vsub.f32 1.5, %v963
    %v965 = vmul.f32 %v960, %v964
    %vm966 = vweird.f32 %v881
    %vm967 = vweird.f32 %v960
    %vm968 = vmor %vm966, %vm967
    %v969 = vsel %vm968, %v960, %v965
    %v970 = vrsqrt.pop %v882
    %v971 = vmul.f32 %v970, %v882
    %v972 = vmul.f32 %v971, %v970
    %v973 = vmul.f32 0.5, %v972
    %v974 = vsub.f32 1.5, %v973
    %v975 = vmul.f32 %v970, %v974
    %vm976 = vweird.f32 %v882
    %vm977 = vweird.f32 %v970
    %vm978 = vmor %vm976, %vm977
    %v979 = vsel %vm978, %v970, %v975
    %v980 = vrsqrt.pop %v883
    %v981 = vmul.f32 %v980, %v883
    %v982 = vmul.f32 %v981, %v980
    %v983 = vmul.f32 0.5, %v982
    %v984 = vsub.f32 1.5, %v983
    %v985 = vmul.f32 %v980, %v984
    %vm986 = vweird.f32 %v883
    %vm987 = vweird.f32 %v980
    %vm988 = vmor %vm986, %vm987
    %v989 = vsel %vm988, %v980, %v985
    %v990 = vrsqrt.pop %v884
    %v991 = vmul.f32 %v990, %v884
    %v992 = vmul.f32 %v991, %v990
    %v993 = vmul.f32 0.5, %v992
    %v994 = vsub.f32 1.5, %v993
    %v995 = vmul.f32 %v990, %v994
    %vm996 = vweird.f32 %v884
    %vm997 = vweird.f32 %v990
    %vm998 = vmor %vm996, %vm997
    %v999 = vsel %vm998, %v990, %v995
    %v1000 = vrsqrt.pop %v885
    %v1001 = vmul.f32 %v1000, %v885
    %v1002 = vmul.f32 %v1001, %v1000
    %v1003 = vmul.f32 0.5, %v1002
    %v1004 = vsub.f32 1.5, %v1003
    %v1005 = vmul.f32 %v1000, %v1004
    %vm1006 = vweird.f32 %v885
    %vm1007 = vweird.f32 %v1000
    %vm1008 = vmor %vm1006, %vm1007
    %v1009 = vsel %vm1008, %v1000, %v1005
    %v1010 = vrsqrt.pop %v886
    %v1011 = vmul.f32 %v1010, %v886
    %v1012 = vmul.f32 %v1011, %v1010
    %v1013 = vmul.f32 0.5, %v1012
    %v1014 = vsub.f32 1.5, %v1013
    %v1015 = vmul.f32 %v1010, %v1014
    %vm1016 = vweird.f32 %v886
    %vm1017 = vweird.f32 %v1010
    %vm1018 = vmor %vm1016, %vm1017
    %v1019 = vsel %vm1018, %v1010, %v1015
    %v1020 = vrsqrt.pop %v887
    %v1021 = vmul.f32 %v1020, %v887
    %v1022 = vmul.f32 %v1021, %v1020
    %v1023 = vmul.f32 0.5, %v1022
    %v1024 = vsub.f32 1.5, %v1023
    %v1025 = vmul.f32 %v1020, %v1024
    %vm1026 = vweird.f32 %v887
    %vm1027 = vweird.f32 %v1020
    %vm1028 = vmor %vm1026, %vm1027
    %v1029 = vsel %vm1028, %v1020, %v1025
    %v1030 = vrsqrt.pop %v888
    %v1031 = vmul.f32 %v1030, %v888
    %v1032 = vmul.f32 %v1031, %v1030
    %v1033 = vmul.f32 0.5, %v1032
    %v1034 = vsub.f32 1.5, %v1033
    %v1035 = vmul.f32 %v1030, %v1034
    %vm1036 = vweird.f32 %v888
    %vm1037 = vweird.f32 %v1030
    %vm1038 = vmor %vm1036, %vm1037
    %v1039 = vsel %vm1038, %v1030, %v1035
    %v1040 = vrsqrt.pop %v889
    %v1041 = vmul.f32 %v1040, %v889
    %v1042 = vmul.f32 %v1041, %v1040
    %v1043 = vmul.f32 0.5, %v1042
    %v1044 = vsub.f32 1.5, %v1043
    %v1045 = vmul.f32 %v1040, %v1044
    %vm1046 = vweird.f32 %v889
    %vm1047 = vweird.f32 %v1040
    %vm1048 = vmor %vm1046, %vm1047
    %v1049 = vsel %vm1048, %v1040, %v1045
    %v1050 = vmul.f32 %v899, %v899
    %v1051 = vmul.f32 %v909, %v909
    %v1052 = vmul.f32 %v919, %v919
    %v1053 = vmul.f32 %v929, %v929
    %v1054 = vmul.f32 %v939, %v939
    %v1055 = vmul.f32 %v949, %v949
    %v1056 = vmul.f32 %v959, %v959
    %v1057 = vmul.f32 %v969, %v969
    %v1058 = vmul.f32 %v979, %v979
    %v1059 = vmul.f32 %v989, %v989
    %v1060 = vmul.f32 %v999, %v999
    %v1061 = vmul.f32 %v1009, %v1009
    %v1062 = vmul.f32 %v1019, %v1019
    %v1063 = vmul.f32 %v1029, %v1029
    %v1064 = vmul.f32 %v1039, %v1039
    %v1065 = vmul.f32 %v1049, %v1049
    %v1066 = vmul.f32 %v1050, %v1050
    %v1067 = vmul.f32 %v1051, %v1051
    %v1068 = vmul.f32 %v1052, %v1052
    %v1069 = vmul.f32 %v1053, %v1053
    %v1070 = vmul.f32 %v1054, %v1054
    %v1071 = vmul.f32 %v1055, %v1055
    %v1072 = vmul.f32 %v1056, %v1056
    %v1073 = vmul.f32 %v1057, %v1057
    %v1074 = vmul.f32 %v1058, %v1058
    %v1075 = vmul.f32 %v1059, %v1059
    %v1076 = vmul.f32 %v1060, %v1060
    %v1077 = vmul.f32 %v1061, %v1061
    %v1078 = vmul.f32 %v1062, %v1062
    %v1079 = vmul.f32 %v1063, %v1063
    %v1080 = vmul.f32 %v1064, %v1064
    %v1081 = vmul.f32 %v1065, %v1065
    %v1082 = vmul.f32 %v1066, %v899
    %v1083 = vmul.f32 %v1067, %v909
    %v1084 = vmul.f32 %v1068, %v919
    %v1085 = vmul.f32 %v1069, %v929
    %v1086 = vmul.f32 %v1070, %v939
    %v1087 = vmul.f32 %v1071, %v949
    %v1088 = vmul.f32 %v1072, %v959
    %v1089 = vmul.f32 %v1073, %v969
    %v1090 = vmul.f32 %v1074, %v979
    %v1091 = vmul.f32 %v1075, %v989
    %v1092 = vmul.f32 %v1076, %v999
    %v1093 = vmul.f32 %v1077, %v1009
    %v1094 = vmul.f32 %v1078, %v1019
    %v1095 = vmul.f32 %v1079, %v1029
    %v1096 = vmul.f32 %v1080, %v1039
    %v1097 = vmul.f32 %v1081, %v1049
    %v1098 = vadd.f32 %v1082, %v1083
    %v1099 = vadd.f32 %v1098, %v1084
    %v1100 = vadd.f32 %v1099, %v1085
    %v1101 = vadd.f32 %v1100, %v1086
    %v1102 = vadd.f32 %v1101, %v1087
    %v1103 = vadd.f32 %v1102, %v1088
    %v1104 = vadd.f32 %v1103, %v1089
    %v1105 = vadd.f32 %v1104, %v1090
    %v1106 = vadd.f32 %v1105, %v1091
    %v1107 = vadd.f32 %v1106, %v1092
    %v1108 = vadd.f32 %v1107, %v1093
    %v1109 = vadd.f32 %v1108, %v1094
    %v1110 = vadd.f32 %v1109, %v1095
    %v1111 = vadd.f32 %v1110, %v1096
    %v1112 = vadd.f32 %v1111, %v1097
    %v1113 = vpow.f32 %v1112, -0.4
    %v1114 = vmul.f32 %v90, %v1113
    %v1115 = vmul.f32 %v91, %v1113
    %v1116 = vmul.f32 %v92, %v1113
    %v1117 = vmul.f32 %v93, %v1113
    %v1118 = vmul.f32 %v94, %v1113
    %v1119 = vmul.f32 %v95, %v1113
    %v1120 = vmul.f32 %v96, %v1113
    %v1121 = vmul.f32 %v97, %v1113
    %v1122 = vmul.f32 %v98, %v1113
    %v1123 = vmul.f32 %v99, %v1113
    %v1124 = vmul.f32 %v100, %v1113
    %v1125 = vmul.f32 %v101, %v1113
    %v1126 = vmul.f32 %v102, %v1113
    %v1127 = vmul.f32 %v103, %v1113
    %v1128 = vmul.f32 %v104, %v1113
    %v1129 = vmul.f32 %v105, %v1113
    %v1130 = vadd.f32 %v1114, 1.0
    %v1131 = vadd.f32 %v1115, 1.0
    %v1132 = vadd.f32 %v1116, 1.0
    %v1133 = vadd.f32 %v1117, 1.0
    %v1134 = vadd.f32 %v1118, 1.0
    %v1135 = vadd.f32 %v1119, 1.0
    %v1136 = vadd.f32 %v1120, 1.0
    %v1137 = vadd.f32 %v1121, 1.0
    %v1138 = vadd.f32 %v1122, 1.0
    %v1139 = vadd.f32 %v1123, 1.0
    %v1140 = vadd.f32 %v1124, 1.0
    %v1141 = vadd.f32 %v1125, 1.0
    %v1142 = vadd.f32 %v1126, 1.0
    %v1143 = vadd.f32 %v1127, 1.0
    %v1144 = vadd.f32 %v1128, 1.0
    %v1145 = vadd.f32 %v1129, 1.0
    %v1146 = vrsqrt.pop %v1130
    %v1147 = vmul.f32 %v1146, %v1130
    %v1148 = vmul.f32 %v1147, %v1146
    %v1149 = vmul.f32 0.5, %v1148
    %v1150 = vsub.f32 1.5, %v1149
    %v1151 = vmul.f32 %v1146, %v1150
    %vm1152 = vweird.f32 %v1130
    %vm1153 = vweird.f32 %v1146
    %vm1154 = vmor %vm1152, %vm1153
    %v1155 = vsel %vm1154, %v1146, %v1151
    %v1156 = vrsqrt.pop %v1131
    %v1157 = vmul.f32 %v1156, %v1131
    %v1158 = vmul.f32 %v1157, %v1156
    %v1159 = vmul.f32 0.5, %v1158
    %v1160 = vsub.f32 1.5, %v1159
    %v1161 = vmul.f32 %v1156, %v1160
    %vm1162 = vweird.f32 %v1131
    %vm1163 = vweird.f32 %v1156
    %vm1164 = vmor %vm1162, %vm1163
    %v1165 = vsel %vm1164, %v1156, %v1161
    %v1166 = vrsqrt.pop %v1132
    %v1167 = vmul.f32 %v1166, %v1132
    %v1168 = vmul.f32 %v1167, %v1166
    %v1169 = vmul.f32 0.5, %v1168
    %v1170 = vsub.f32 1.5, %v1169
    %v1171 = vmul.f32 %v1166, %v1170
    %vm1172 = vweird.f32 %v1132
    %vm1173 = vweird.f32 %v1166
    %vm1174 = vmor %vm1172, %vm1173
    %v1175 = vsel %vm1174, %v1166, %v1171
    %v1176 = vrsqrt.pop %v1133
    %v1177 = vmul.f32 %v1176, %v1133
    %v1178 = vmul.f32 %v1177, %v1176
    %v1179 = vmul.f32 0.5, %v1178
    %v1180 = vsub.f32 1.5, %v1179
    %v1181 = vmul.f32 %v1176, %v1180
    %vm1182 = vweird.f32 %v1133
    %vm1183 = vweird.f32 %v1176
    %vm1184 = vmor %vm1182, %vm1183
    %v1185 = vsel %vm1184, %v1176, %v1181
    %v1186 = vrsqrt.pop %v1134
    %v1187 = vmul.f32 %v1186, %v1134
    %v1188 = vmul.f32 %v1187, %v1186
    %v1189 = vmul.f32 0.5, %v1188
    %v1190 = vsub.f32 1.5, %v1189
    %v1191 = vmul.f32 %v1186, %v1190
    %vm1192 = vweird.f32 %v1134
    %vm1193 = vweird.f32 %v1186
    %vm1194 = vmor %vm1192, %vm1193
    %v1195 = vsel %vm1194, %v1186, %v1191
    %v1196 = vrsqrt.pop %v1135
    %v1197 = vmul.f32 %v1196, %v1135
    %v1198 = vmul.f32 %v1197, %v1196
    %v1199 = vmul.f32 0.5, %v1198
    %v1200 = vsub.f32 1.5, %v1199
    %v1201 = vmul.f32 %v1196, %v1200
    %vm1202 = vweird.f32 %v1135
    %vm1203 = vweird.f32 %v1196
    %vm1204 = vmor %vm1202, %vm1203
    %v1205 = vsel %vm1204, %v1196, %v1201
    %v1206 = vrsqrt.pop %v1136
    %v1207 = vmul.f32 %v1206, %v1136
    %v1208 = vmul.f32 %v1207, %v1206
    %v1209 = vmul.f32 0.5, %v1208
    %v1210 = vsub.f32 1.5, %v1209
    %v1211 = vmul.f32 %v1206, %v1210
    %vm1212 = vweird.f32 %v1136
    %vm1213 = vweird.f32 %v1206
    %vm1214 = vmor %vm1212, %vm1213
    %v1215 = vsel %vm1214, %v1206, %v1211
    %v1216 = vrsqrt.pop %v1137
    %v1217 = vmul.f32 %v1216, %v1137
    %v1218 = vmul.f32 %v1217, %v1216
    %v1219 = vmul.f32 0.5, %v1218
    %v1220 = vsub.f32 1.5, %v1219
    %v1221 = vmul.f32 %v1216, %v1220
    %vm1222 = vweird.f32 %v1137
    %vm1223 = vweird.f32 %v1216
    %vm1224 = vmor %vm1222, %vm1223
    %v1225 = vsel %vm1224, %v1216, %v1221
    %v1226 = vrsqrt.pop %v1138
    %v1227 = vmul.f32 %v1226, %v1138
    %v1228 = vmul.f32 %v1227, %v1226
    %v1229 = vmul.f32 0.5, %v1228
    %v1230 = vsub.f32 1.5, %v1229
    %v1231 = vmul.f32 %v1226, %v1230
    %vm1232 = vweird.f32 %v1138
    %vm1233 = vweird.f32 %v1226
    %vm1234 = vmor %vm1232, %vm1233
    %v1235 = vsel %vm1234, %v1226, %v1231
    %v1236 = vrsqrt.pop %v1139
    %v1237 = vmul.f32 %v1236, %v1139
    %v1238 = vmul.f32 %v1237, %v1236
    %v1239 = vmul.f32 0.5, %v1238
    %v1240 = vsub.f32 1.5, %v1239
    %v1241 = vmul.f32 %v1236, %v1240
    %vm1242 = vweird.f32 %v1139
    %vm1243 = vweird.f32 %v1236
    %vm1244 = vmor %vm1242, %vm1243
    %v1245 = vsel %vm1244, %v1236, %v1241
    %v1246 = vrsqrt.pop %v1140
    %v1247 = vmul.f32 %v1246, %v1140
    %v1248 = vmul.f32 %v1247, %v1246
    %v1249 = vmul.f32 0.5, %v1248
    %v1250 = vsub.f32 1.5, %v1249
    %v1251 = vmul.f32 %v1246, %v1250
    %vm1252 = vweird.f32 %v1140
    %vm1253 = vweird.f32 %v1246
    %vm1254 = vmor %vm1252, %vm1253
    %v1255 = vsel %vm1254, %v1246, %v1251
    %v1256 = vrsqrt.pop %v1141
    %v1257 = vmul.f32 %v1256, %v1141
    %v1258 = vmul.f32 %v1257, %v1256
    %v1259 = vmul.f32 0.5, %v1258
    %v1260 = vsub.f32 1.5, %v1259
    %v1261 = vmul.f32 %v1256, %v1260
    %vm1262 = vweird.f32 %v1141
    %vm1263 = vweird.f32 %v1256
    %vm1264 = vmor %vm1262, %vm1263
    %v1265 = vsel %vm1264, %v1256, %v1261
    %v1266 = vrsqrt.pop %v1142
    %v1267 = vmul.f32 %v1266, %v1142
    %v1268 = vmul.f32 %v1267, %v1266
    %v1269 = vmul.f32 0.5, %v1268
    %v1270 = vsub.f32 1.5, %v1269
    %v1271 = vmul.f32 %v1266, %v1270
    %vm1272 = vweird.f32 %v1142
    %vm1273 = vweird.f32 %v1266
    %vm1274 = vmor %vm1272, %vm1273
    %v1275 = vsel %vm1274, %v1266, %v1271
    %v1276 = vrsqrt.pop %v1143
    %v1277 = vmul.f32 %v1276, %v1143
    %v1278 = vmul.f32 %v1277, %v1276
    %v1279 = vmul.f32 0.5, %v1278
    %v1280 = vsub.f32 1.5, %v1279
    %v1281 = vmul.f32 %v1276, %v1280
    %vm1282 = vweird.f32 %v1143
    %vm1283 = vweird.f32 %v1276
    %vm1284 = vmor %vm1282, %vm1283
    %v1285 = vsel %vm1284, %v1276, %v1281
    %v1286 = vrsqrt.pop %v1144
    %v1287 = vmul.f32 %v1286, %v1144
    %v1288 = vmul.f32 %v1287, %v1286
    %v1289 = vmul.f32 0.5, %v1288
    %v1290 = vsub.f32 1.5, %v1289
    %v1291 = vmul.f32 %v1286, %v1290
    %vm1292 = vweird.f32 %v1144
    %vm1293 = vweird.f32 %v1286
    %vm1294 = vmor %vm1292, %vm1293
    %v1295 = vsel %vm1294, %v1286, %v1291
    %v1296 = vrsqrt.pop %v1145
    %v1297 = vmul.f32 %v1296, %v1145
    %v1298 = vmul.f32 %v1297, %v1296
    %v1299 = vmul.f32 0.5, %v1298
    %v1300 = vsub.f32 1.5, %v1299
    %v1301 = vmul.f32 %v1296, %v1300
    %vm1302 = vweird.f32 %v1145
    %vm1303 = vweird.f32 %v1296
    %vm1304 = vmor %vm1302, %vm1303
    %v1305 = vsel %vm1304, %v1296, %v1301
    %v1306 = vmul.f32 %v1155, %v1155
    %v1307 = vmul.f32 %v1165, %v1165
    %v1308 = vmul.f32 %v1175, %v1175
    %v1309 = vmul.f32 %v1185, %v1185
    %v1310 = vmul.f32 %v1195, %v1195
    %v1311 = vmul.f32 %v1205, %v1205
    %v1312 = vmul.f32 %v1215, %v1215
    %v1313 = vmul.f32 %v1225, %v1225
    %v1314 = vmul.f32 %v1235, %v1235
    %v1315 = vmul.f32 %v1245, %v1245
    %v1316 = vmul.f32 %v1255, %v1255
    %v1317 = vmul.f32 %v1265, %v1265
    %v1318 = vmul.f32 %v1275, %v1275
    %v1319 = vmul.f32 %v1285, %v1285
    %v1320 = vmul.f32 %v1295, %v1295
    %v1321 = vmul.f32 %v1305, %v1305
    %v1322 = vmul.f32 %v1306, %v1306
    %v1323 = vmul.f32 %v1307, %v1307
    %v1324 = vmul.f32 %v1308, %v1308
    %v1325 = vmul.f32 %v1309, %v1309
    %v1326 = vmul.f32 %v1310, %v1310
    %v1327 = vmul.f32 %v1311, %v1311
    %v1328 = vmul.f32 %v1312, %v1312
    %v1329 = vmul.f32 %v1313, %v1313
    %v1330 = vmul.f32 %v1314, %v1314
    %v1331 = vmul.f32 %v1315, %v1315
    %v1332 = vmul.f32 %v1316, %v1316
    %v1333 = vmul.f32 %v1317, %v1317
    %v1334 = vmul.f32 %v1318, %v1318
    %v1335 = vmul.f32 %v1319, %v1319
    %v1336 = vmul.f32 %v1320, %v1320
    %v1337 = vmul.f32 %v1321, %v1321
    %v1338 = vmul.f32 %v1322, %v1155
    %v1339 = vmul.f32 %v1323, %v1165
    %v1340 = vmul.f32 %v1324, %v1175
    %v1341 = vmul.f32 %v1325, %v1185
    %v1342 = vmul.f32 %v1326, %v1195
    %v1343 = vmul.f32 %v1327, %v1205
    %v1344 = vmul.f32 %v1328, %v1215
    %v1345 = vmul.f32 %v1329, %v1225
    %v1346 = vmul.f32 %v1330, %v1235
    %v1347 = vmul.f32 %v1331, %v1245
    %v1348 = vmul.f32 %v1332, %v1255
    %v1349 = vmul.f32 %v1333, %v1265
    %v1350 = vmul.f32 %v1334, %v1275
    %v1351 = vmul.f32 %v1335, %v1285
    %v1352 = vmul.f32 %v1336, %v1295
    %v1353 = vmul.f32 %v1337, %v1305
    %v1354 = vadd.f32 %v1338, %v1339
    %v1355 = vadd.f32 %v1354, %v1340
    %v1356 = vadd.f32 %v1355, %v1341
    %v1357 = vadd.f32 %v1356, %v1342
    %v1358 = vadd.f32 %v1357, %v1343
    %v1359 = vadd.f32 %v1358, %v1344
    %v1360 = vadd.f32 %v1359, %v1345
    %v1361 = vadd.f32 %v1360, %v1346
    %v1362 = vadd.f32 %v1361, %v1347
    %v1363 = vadd.f32 %v1362, %v1348
    %v1364 = vadd.f32 %v1363, %v1349
    %v1365 = vadd.f32 %v1364, %v1350
    %v1366 = vadd.f32 %v1365, %v1351
    %v1367 = vadd.f32 %v1366, %v1352
    %v1368 = vadd.f32 %v1367, %v1353
    %v1369 = vpow.f32 %v1368, -0.4
    %v1370 = vmul.f32 %v90, %v1369
    %v1371 = vmul.f32 %v91, %v1369
    %v1372 = vmul.f32 %v92, %v1369
    %v1373 = vmul.f32 %v93, %v1369
    %v1374 = vmul.f32 %v94, %v1369
    %v1375 = vmul.f32 %v95, %v1369
    %v1376 = vmul.f32 %v96, %v1369
    %v1377 = vmul.f32 %v97, %v1369
    %v1378 = vmul.f32 %v98, %v1369
    %v1379 = vmul.f32 %v99, %v1369
    %v1380 = vmul.f32 %v100, %v1369
    %v1381 = vmul.f32 %v101, %v1369
    %v1382 = vmul.f32 %v102, %v1369
    %v1383 = vmul.f32 %v103, %v1369
    %v1384 = vmul.f32 %v104, %v1369
    %v1385 = vmul.f32 %v105, %v1369
    %v1386 = vadd.f32 %v1370, 1.0
    %v1387 = vadd.f32 %v1371, 1.0
    %v1388 = vadd.f32 %v1372, 1.0
    %v1389 = vadd.f32 %v1373, 1.0
    %v1390 = vadd.f32 %v1374, 1.0
    %v1391 = vadd.f32 %v1375, 1.0
    %v1392 = vadd.f32 %v1376, 1.0
    %v1393 = vadd.f32 %v1377, 1.0
    %v1394 = vadd.f32 %v1378, 1.0
    %v1395 = vadd.f32 %v1379, 1.0
    %v1396 = vadd.f32 %v1380, 1.0
    %v1397 = vadd.f32 %v1381, 1.0
    %v1398 = vadd.f32 %v1382, 1.0
    %v1399 = vadd.f32 %v1383, 1.0
    %v1400 = vadd.f32 %v1384, 1.0
    %v1401 = vadd.f32 %v1385, 1.0
    %v1402 = vrsqrt.pop %v1386
    %v1403 = vmul.f32 %v1402, %v1386
    %v1404 = vmul.f32 %v1403, %v1402
    %v1405 = vmul.f32 0.5, %v1404
    %v1406 = vsub.f32 1.5, %v1405
    %v1407 = vmul.f32 %v1402, %v1406
    %vm1408 = vweird.f32 %v1386
    %vm1409 = vweird.f32 %v1402
    %vm1410 = vmor %vm1408, %vm1409
    %v1411 = vsel %vm1410, %v1402, %v1407
    %v1412 = vrsqrt.pop %v1387
    %v1413 = vmul.f32 %v1412, %v1387
    %v1414 = vmul.f32 %v1413, %v1412
    %v1415 = vmul.f32 0.5, %v1414
    %v1416 = vsub.f32 1.5, %v1415
    %v1417 = vmul.f32 %v1412, %v1416
    %vm1418 = vweird.f32 %v1387
    %vm1419 = vweird.f32 %v1412
    %vm1420 = vmor %vm1418, %vm1419
    %v1421 = vsel %vm1420, %v1412, %v1417
    %v1422 = vrsqrt.pop %v1388
    %v1423 = vmul.f32 %v1422, %v1388
    %v1424 = vmul.f32 %v1423, %v1422
    %v1425 = vmul.f32 0.5, %v1424
    %v1426 = vsub.f32 1.5, %v1425
    %v1427 = vmul.f32 %v1422, %v1426
    %vm1428 = vweird.f32 %v1388
    %vm1429 = vweird.f32 %v1422
    %vm1430 = vmor %vm1428, %vm1429
    %v1431 = vsel %vm1430, %v1422, %v1427
    %v1432 = vrsqrt.pop %v1389
    %v1433 = vmul.f32 %v1432, %v1389
    %v1434 = vmul.f32 %v1433, %v1432
    %v1435 = vmul.f32 0.5, %v1434
    %v1436 = vsub.f32 1.5, %v1435
    %v1437 = vmul.f32 %v1432, %v1436
    %vm1438 = vweird.f32 %v1389
    %vm1439 = vweird.f32 %v1432
    %vm1440 = vmor %vm1438, %vm1439
    %v1441 = vsel %vm1440, %v1432, %v1437
    %v1442 = vrsqrt.pop %v1390
    %v1443 = vmul.f32 %v1442, %v1390
    %v1444 = vmul.f32 %v1443, %v1442
    %v1445 = vmul.f32 0.5, %v1444
    %v1446 = vsub.f32 1.5, %v1445
    %v1447 = vmul.f32 %v1442, %v1446
    %vm1448 = vweird.f32 %v1390
    %vm1449 = vweird.f32 %v1442
    %vm1450 = vmor %vm1448, %vm1449
    %v1451 = vsel %vm1450, %v1442, %v1447
    %v1452 = vrsqrt.pop %v1391
    %v1453 = vmul.f32 %v1452, %v1391
    %v1454 = vmul.f32 %v1453, %v1452
    %v1455 = vmul.f32 0.5, %v1454
    %v1456 = vsub.f32 1.5, %v1455
    %v1457 = vmul.f32 %v1452, %v1456
    %vm1458 = vweird.f32 %v1391
    %vm1459 = vweird.f32 %v1452
    %vm1460 = vmor %vm1458, %vm1459
    %v1461 = vsel %vm1460, %v1452, %v1457
    %v1462 = vrsqrt.pop %v1392
    %v1463 = vmul.f32 %v1462, %v1392
    %v1464 = vmul.f32 %v1463, %v1462
    %v1465 = vmul.f32 0.5, %v1464
    %v1466 = vsub.f32 1.5, %v1465
    %v1467 = vmul.f32 %v1462, %v1466
    %vm1468 = vweird.f32 %v1392
    %vm1469 = vweird.f32 %v1462
    %vm1470 = vmor %vm1468, %vm1469
    %v1471 = vsel %vm1470, %v1462, %v1467
    %v1472 = vrsqrt.pop %v1393
    %v1473 = vmul.f32 %v1472, %v1393
    %v1474 = vmul.f32 %v1473, %v1472
    %v1475 = vmul.f32 0.5, %v1474
    %v1476 = vsub.f32 1.5, %v1475
    %v1477 = vmul.f32 %v1472, %v1476
    %vm1478 = vweird.f32 %v1393
    %vm1479 = vweird.f32 %v1472
    %vm1480 = vmor %vm1478, %vm1479
    %v1481 = vsel %vm1480, %v1472, %v1477
    %v1482 = vrsqrt.pop %v1394
    %v1483 = vmul.f32 %v1482, %v1394
    %v1484 = vmul.f32 %v1483, %v1482
    %v1485 = vmul.f32 0.5, %v1484
    %v1486 = vsub.f32 1.5, %v1485
    %v1487 = vmul.f32 %v1482, %v1486
    %vm1488 = vweird.f32 %v1394
    %vm1489 = vweird.f32 %v1482
    %vm1490 = vmor %vm1488, %vm1489
    %v1491 = vsel %vm1490, %v1482, %v1487
    %v1492 = vrsqrt.pop %v1395
    %v1493 = vmul.f32 %v1492, %v1395
    %v1494 = vmul.f32 %v1493, %v1492
    %v1495 = vmul.f32 0.5, %v1494
    %v1496 = vsub.f32 1.5, %v1495
    %v1497 = vmul.f32 %v1492, %v1496
    %vm1498 = vweird.f32 %v1395
    %vm1499 = vweird.f32 %v1492
    %vm1500 = vmor %vm1498, %vm1499
    %v1501 = vsel %vm1500, %v1492, %v1497
    %v1502 = vrsqrt.pop %v1396
    %v1503 = vmul.f32 %v1502, %v1396
    %v1504 = vmul.f32 %v1503, %v1502
    %v1505 = vmul.f32 0.5, %v1504
    %v1506 = vsub.f32 1.5, %v1505
    %v1507 = vmul.f32 %v1502, %v1506
    %vm1508 = vweird.f32 %v1396
    %vm1509 = vweird.f32 %v1502
    %vm1510 = vmor %vm1508, %vm1509
    %v1511 = vsel %vm1510, %v1502, %v1507
    %v1512 = vrsqrt.pop %v1397
    %v1513 = vmul.f32 %v1512, %v1397
    %v1514 = vmul.f32 %v1513, %v1512
    %v1515 = vmul.f32 0.5, %v1514
    %v1516 = vsub.f32 1.5, %v1515
    %v1517 = vmul.f32 %v1512, %v1516
    %vm1518 = vweird.f32 %v1397
    %vm1519 = vweird.f32 %v1512
    %vm1520 = vmor %vm1518, %vm1519
    %v1521 = vsel %vm1520, %v1512, %v1517
    %v1522 = vrsqrt.pop %v1398
    %v1523 = vmul.f32 %v1522, %v1398
    %v1524 = vmul.f32 %v1523, %v1522
    %v1525 = vmul.f32 0.5, %v1524
    %v1526 = vsub.f32 1.5, %v1525
    %v1527 = vmul.f32 %v1522, %v1526
    %vm1528 = vweird.f32 %v1398
    %vm1529 = vweird.f32 %v1522
    %vm1530 = vmor %vm1528, %vm1529
    %v1531 = vsel %vm1530, %v1522, %v1527
    %v1532 = vrsqrt.pop %v1399
    %v1533 = vmul.f32 %v1532, %v1399
    %v1534 = vmul.f32 %v1533, %v1532
    %v1535 = vmul.f32 0.5, %v1534
    %v1536 = vsub.f32 1.5, %v1535
    %v1537 = vmul.f32 %v1532, %v1536
    %vm1538 = vweird.f32 %v1399
    %vm1539 = vweird.f32 %v1532
    %vm1540 = vmor %vm1538, %vm1539
    %v1541 = vsel %vm1540, %v1532, %v1537
    %v1542 = vrsqrt.pop %v1400
    %v1543 = vmul.f32 %v1542, %v1400
    %v1544 = vmul.f32 %v1543, %v1542
    %v1545 = vmul.f32 0.5, %v1544
    %v1546 = vsub.f32 1.5, %v1545
    %v1547 = vmul.f32 %v1542, %v1546
    %vm1548 = vweird.f32 %v1400
    %vm1549 = vweird.f32 %v1542
    %vm1550 = vmor %vm1548, %vm1549
    %v1551 = vsel %vm1550, %v1542, %v1547
    %v1552 = vrsqrt.pop %v1401
    %v1553 = vmul.f32 %v1552, %v1401
    %v1554 = vmul.f32 %v1553, %v1552
    %v1555 = vmul.f32 0.5, %v1554
    %v1556 = vsub.f32 1.5, %v1555
    %v1557 = vmul.f32 %v1552, %v1556
    %vm1558 = vweird.f32 %v1401
    %vm1559 = vweird.f32 %v1552
    %vm1560 = vmor %vm1558, %vm1559
    %v1561 = vsel %vm1560, %v1552, %v1557
    %v1562 = vmul.f32 %v1411, %v1411
    %v1563 = vmul.f32 %v1421, %v1421
    %v1564 = vmul.f32 %v1431, %v1431
    %v1565 = vmul.f32 %v1441, %v1441
    %v1566 = vmul.f32 %v1451, %v1451
    %v1567 = vmul.f32 %v1461, %v1461
    %v1568 = vmul.f32 %v1471, %v1471
    %v1569 = vmul.f32 %v1481, %v1481
    %v1570 = vmul.f32 %v1491, %v1491
    %v1571 = vmul.f32 %v1501, %v1501
    %v1572 = vmul.f32 %v1511, %v1511
    %v1573 = vmul.f32 %v1521, %v1521
    %v1574 = vmul.f32 %v1531, %v1531
    %v1575 = vmul.f32 %v1541, %v1541
    %v1576 = vmul.f32 %v1551, %v1551
    %v1577 = vmul.f32 %v1561, %v1561
    %v1578 = vmul.f32 %v1562, %v1562
    %v1579 = vmul.f32 %v1563, %v1563
    %v1580 = vmul.f32 %v1564, %v1564
    %v1581 = vmul.f32 %v1565, %v1565
    %v1582 = vmul.f32 %v1566, %v1566
    %v1583 = vmul.f32 %v1567, %v1567
    %v1584 = vmul.f32 %v1568, %v1568
    %v1585 = vmul.f32 %v1569, %v1569
    %v1586 = vmul.f32 %v1570, %v1570
    %v1587 = vmul.f32 %v1571, %v1571
    %v1588 = vmul.f32 %v1572, %v1572
    %v1589 = vmul.f32 %v1573, %v1573
    %v1590 = vmul.f32 %v1574, %v1574
    %v1591 = vmul.f32 %v1575, %v1575
    %v1592 = vmul.f32 %v1576, %v1576
    %v1593 = vmul.f32 %v1577, %v1577
    %v1594 = vmul.f32 %v1578, %v1411
    %v1595 = vmul.f32 %v1579, %v1421
    %v1596 = vmul.f32 %v1580, %v1431
    %v1597 = vmul.f32 %v1581, %v1441
    %v1598 = vmul.f32 %v1582, %v1451
    %v1599 = vmul.f32 %v1583, %v1461
    %v1600 = vmul.f32 %v1584, %v1471
    %v1601 = vmul.f32 %v1585, %v1481
    %v1602 = vmul.f32 %v1586, %v1491
    %v1603 = vmul.f32 %v1587, %v1501
    %v1604 = vmul.f32 %v1588, %v1511
    %v1605 = vmul.f32 %v1589, %v1521
    %v1606 = vmul.f32 %v1590, %v1531
    %v1607 = vmul.f32 %v1591, %v1541
    %v1608 = vmul.f32 %v1592, %v1551
    %v1609 = vmul.f32 %v1593, %v1561
    %v1610 = vadd.f32 %v1594, %v1595
    %v1611 = vadd.f32 %v1610, %v1596
    %v1612 = vadd.f32 %v1611, %v1597
    %v1613 = vadd.f32 %v1612, %v1598
    %v1614 = vadd.f32 %v1613, %v1599
    %v1615 = vadd.f32 %v1614, %v1600
    %v1616 = vadd.f32 %v1615, %v1601
    %v1617 = vadd.f32 %v1616, %v1602
    %v1618 = vadd.f32 %v1617, %v1603
    %v1619 = vadd.f32 %v1618, %v1604
    %v1620 = vadd.f32 %v1619, %v1605
    %v1621 = vadd.f32 %v1620, %v1606
    %v1622 = vadd.f32 %v1621, %v1607
    %v1623 = vadd.f32 %v1622, %v1608
    %v1624 = vadd.f32 %v1623, %v1609
    %v1625 = vpow.f32 %v1624, 0.4
    %v1626 = vadd.f32 %v90, %v1625
    %v1627 = vadd.f32 %v91, %v1625
    %v1628 = vadd.f32 %v92, %v1625
    %v1629 = vadd.f32 %v93, %v1625
    %v1630 = vadd.f32 %v94, %v1625
    %v1631 = vadd.f32 %v95, %v1625
    %v1632 = vadd.f32 %v96, %v1625
    %v1633 = vadd.f32 %v97, %v1625
    %v1634 = vadd.f32 %v98, %v1625
    %v1635 = vadd.f32 %v99, %v1625
    %v1636 = vadd.f32 %v100, %v1625
    %v1637 = vadd.f32 %v101, %v1625
    %v1638 = vadd.f32 %v102, %v1625
    %v1639 = vadd.f32 %v103, %v1625
    %v1640 = vadd.f32 %v104, %v1625
    %v1641 = vadd.f32 %v105, %v1625
    %v1642 = vrsqrt.pop %v1626
    %v1643 = vmul.f32 %v1642, %v1626
    %v1644 = vmul.f32 %v1643, %v1642
    %v1645 = vmul.f32 0.5, %v1644
    %v1646 = vsub.f32 1.5, %v1645
    %v1647 = vmul.f32 %v1642, %v1646
    %vm1648 = vweird.f32 %v1626
    %vm1649 = vweird.f32 %v1642
    %vm1650 = vmor %vm1648, %vm1649
    %v1651 = vsel %vm1650, %v1642, %v1647
    %v1652 = vrsqrt.pop %v1627
    %v1653 = vmul.f32 %v1652, %v1627
    %v1654 = vmul.f32 %v1653, %v1652
    %v1655 = vmul.f32 0.5, %v1654
    %v1656 = vsub.f32 1.5, %v1655
    %v1657 = vmul.f32 %v1652, %v1656
    %vm1658 = vweird.f32 %v1627
    %vm1659 = vweird.f32 %v1652
    %vm1660 = vmor %vm1658, %vm1659
    %v1661 = vsel %vm1660, %v1652, %v1657
    %v1662 = vrsqrt.pop %v1628
    %v1663 = vmul.f32 %v1662, %v1628
    %v1664 = vmul.f32 %v1663, %v1662
    %v1665 = vmul.f32 0.5, %v1664
    %v1666 = vsub.f32 1.5, %v1665
    %v1667 = vmul.f32 %v1662, %v1666
    %vm1668 = vweird.f32 %v1628
    %vm1669 = vweird.f32 %v1662
    %vm1670 = vmor %vm1668, %vm1669
    %v1671 = vsel %vm1670, %v1662, %v1667
    %v1672 = vrsqrt.pop %v1629
    %v1673 = vmul.f32 %v1672, %v1629
    %v1674 = vmul.f32 %v1673, %v1672
    %v1675 = vmul.f32 0.5, %v1674
    %v1676 = vsub.f32 1.5, %v1675
    %v1677 = vmul.f32 %v1672, %v1676
    %vm1678 = vweird.f32 %v1629
    %vm1679 = vweird.f32 %v1672
    %vm1680 = vmor %vm1678, %vm1679
    %v1681 = vsel %vm1680, %v1672, %v1677
    %v1682 = vrsqrt.pop %v1630
    %v1683 = vmul.f32 %v1682, %v1630
    %v1684 = vmul.f32 %v1683, %v1682
    %v1685 = vmul.f32 0.5, %v1684
    %v1686 = vsub.f32 1.5, %v1685
    %v1687 = vmul.f32 %v1682, %v1686
    %vm1688 = vweird.f32 %v1630
    %vm1689 = vweird.f32 %v1682
    %vm1690 = vmor %vm1688, %vm1689
    %v1691 = vsel %vm1690, %v1682, %v1687
    %v1692 = vrsqrt.pop %v1631
    %v1693 = vmul.f32 %v1692, %v1631
    %v1694 = vmul.f32 %v1693, %v1692
    %v1695 = vmul.f32 0.5, %v1694
    %v1696 = vsub.f32 1.5, %v1695
    %v1697 = vmul.f32 %v1692, %v1696
    %vm1698 = vweird.f32 %v1631
    %vm1699 = vweird.f32 %v1692
    %vm1700 = vmor %vm1698, %vm1699
    %v1701 = vsel %vm1700, %v1692, %v1697
    %v1702 = vrsqrt.pop %v1632
    %v1703 = vmul.f32 %v1702, %v1632
    %v1704 = vmul.f32 %v1703, %v1702
    %v1705 = vmul.f32 0.5, %v1704
    %v1706 = vsub.f32 1.5, %v1705
    %v1707 = vmul.f32 %v1702, %v1706
    %vm1708 = vweird.f32 %v1632
    %vm1709 = vweird.f32 %v1702
    %vm1710 = vmor %vm1708, %vm1709
    %v1711 = vsel %vm1710, %v1702, %v1707
    %v1712 = vrsqrt.pop %v1633
    %v1713 = vmul.f32 %v1712, %v1633
    %v1714 = vmul.f32 %v1713, %v1712
    %v1715 = vmul.f32 0.5, %v1714
    %v1716 = vsub.f32 1.5, %v1715
    %v1717 = vmul.f32 %v1712, %v1716
    %vm1718 = vweird.f32 %v1633
    %vm1719 = vweird.f32 %v1712
    %vm1720 = vmor %vm1718, %vm1719
    %v1721 = vsel %vm1720, %v1712, %v1717
    %v1722 = vrsqrt.pop %v1634
    %v1723 = vmul.f32 %v1722, %v1634
    %v1724 = vmul.f32 %v1723, %v1722
    %v1725 = vmul.f32 0.5, %v1724
    %v1726 = vsub.f32 1.5, %v1725
    %v1727 = vmul.f32 %v1722, %v1726
    %vm1728 = vweird.f32 %v1634
    %vm1729 = vweird.f32 %v1722
    %vm1730 = vmor %vm1728, %vm1729
    %v1731 = vsel %vm1730, %v1722, %v1727
    %v1732 = vrsqrt.pop %v1635
    %v1733 = vmul.f32 %v1732, %v1635
    %v1734 = vmul.f32 %v1733, %v1732
    %v1735 = vmul.f32 0.5, %v1734
    %v1736 = vsub.f32 1.5, %v1735
    %v1737 = vmul.f32 %v1732, %v1736
    %vm1738 = vweird.f32 %v1635
    %vm1739 = vweird.f32 %v1732
    %vm1740 = vmor %vm1738, %vm1739
    %v1741 = vsel %vm1740, %v1732, %v1737
    %v1742 = vrsqrt.pop %v1636
    %v1743 = vmul.f32 %v1742, %v1636
    %v1744 = vmul.f32 %v1743, %v1742
    %v1745 = vmul.f32 0.5, %v1744
    %v1746 = vsub.f32 1.5, %v1745
    %v1747 = vmul.f32 %v1742, %v1746
    %vm1748 = vweird.f32 %v1636
    %vm1749 = vweird.f32 %v1742
    %vm1750 = vmor %vm1748, %vm1749
    %v1751 = vsel %vm1750, %v1742, %v1747
    %v1752 = vrsqrt.pop %v1637
    %v1753 = vmul.f32 %v1752, %v1637
    %v1754 = vmul.f32 %v1753, %v1752
    %v1755 = vmul.f32 0.5, %v1754
    %v1756 = vsub.f32 1.5, %v1755
    %v1757 = vmul.f32 %v1752, %v1756
    %vm1758 = vweird.f32 %v1637
    %vm1759 = vweird.f32 %v1752
    %vm1760 = vmor %vm1758, %vm1759
    %v1761 = vsel %vm1760, %v1752, %v1757
    %v1762 = vrsqrt.pop %v1638
    %v1763 = vmul.f32 %v1762, %v1638
    %v1764 = vmul.f32 %v1763, %v1762
    %v1765 = vmul.f32 0.5, %v1764
    %v1766 = vsub.f32 1.5, %v1765
    %v1767 = vmul.f32 %v1762, %v1766
    %vm1768 = vweird.f32 %v1638
    %vm1769 = vweird.f32 %v1762
    %vm1770 = vmor %vm1768, %vm1769
    %v1771 = vsel %vm1770, %v1762, %v1767
    %v1772 = vrsqrt.pop %v1639
    %v1773 = vmul.f32 %v1772, %v1639
    %v1774 = vmul.f32 %v1773, %v1772
    %v1775 = vmul.f32 0.5, %v1774
    %v1776 = vsub.f32 1.5, %v1775
    %v1777 = vmul.f32 %v1772, %v1776
    %vm1778 = vweird.f32 %v1639
    %vm1779 = vweird.f32 %v1772
    %vm1780 = vmor %vm1778, %vm1779
    %v1781 = vsel %vm1780, %v1772, %v1777
    %v1782 = vrsqrt.pop %v1640
    %v1783 = vmul.f32 %v1782, %v1640
    %v1784 = vmul.f32 %v1783, %v1782
    %v1785 = vmul.f32 0.5, %v1784
    %v1786 = vsub.f32 1.5, %v1785
    %v1787 = vmul.f32 %v1782, %v1786
    %vm1788 = vweird.f32 %v1640
    %vm1789 = vweird.f32 %v1782
    %vm1790 = vmor %vm1788, %vm1789
    %v1791 = vsel %vm1790, %v1782, %v1787
    %v1792 = vrsqrt.pop %v1641
    %v1793 = vmul.f32 %v1792, %v1641
    %v1794 = vmul.f32 %v1793, %v1792
    %v1795 = vmul.f32 0.5, %v1794
    %v1796 = vsub.f32 1.5, %v1795
    %v1797 = vmul.f32 %v1792, %v1796
    %vm1798 = vweird.f32 %v1641
    %vm1799 = vweird.f32 %v1792
    %vm1800 = vmor %vm1798, %vm1799
    %v1801 = vsel %vm1800, %v1792, %v1797
    %v1802 = vmul.f32 %v1651, %v1651
    %v1803 = vmul.f32 %v1661, %v1661
    %v1804 = vmul.f32 %v1671, %v1671
    %v1805 = vmul.f32 %v1681, %v1681
    %v1806 = vmul.f32 %v1691, %v1691
    %v1807 = vmul.f32 %v1701, %v1701
    %v1808 = vmul.f32 %v1711, %v1711
    %v1809 = vmul.f32 %v1721, %v1721
    %v1810 = vmul.f32 %v1731, %v1731
    %v1811 = vmul.f32 %v1741, %v1741
    %v1812 = vmul.f32 %v1751, %v1751
    %v1813 = vmul.f32 %v1761, %v1761
    %v1814 = vmul.f32 %v1771, %v1771
    %v1815 = vmul.f32 %v1781, %v1781
    %v1816 = vmul.f32 %v1791, %v1791
    %v1817 = vmul.f32 %v1801, %v1801
    %v1818 = vmul.f32 %v1802, %v1802
    %v1819 = vmul.f32 %v1803, %v1803
    %v1820 = vmul.f32 %v1804, %v1804
    %v1821 = vmul.f32 %v1805, %v1805
    %v1822 = vmul.f32 %v1806, %v1806
    %v1823 = vmul.f32 %v1807, %v1807
    %v1824 = vmul.f32 %v1808, %v1808
    %v1825 = vmul.f32 %v1809, %v1809
    %v1826 = vmul.f32 %v1810, %v1810
    %v1827 = vmul.f32 %v1811, %v1811
    %v1828 = vmul.f32 %v1812, %v1812
    %v1829 = vmul.f32 %v1813, %v1813
    %v1830 = vmul.f32 %v1814, %v1814
    %v1831 = vmul.f32 %v1815, %v1815
    %v1832 = vmul.f32 %v1816, %v1816
    %v1833 = vmul.f32 %v1817, %v1817
    %v1834 = vmul.f32 %v1818, %v1651
    %v1835 = vmul.f32 %v1819, %v1661
    %v1836 = vmul.f32 %v1820, %v1671
    %v1837 = vmul.f32 %v1821, %v1681
    %v1838 = vmul.f32 %v1822, %v1691
    %v1839 = vmul.f32 %v1823, %v1701
    %v1840 = vmul.f32 %v1824, %v1711
    %v1841 = vmul.f32 %v1825, %v1721
    %v1842 = vmul.f32 %v1826, %v1731
    %v1843 = vmul.f32 %v1827, %v1741
    %v1844 = vmul.f32 %v1828, %v1751
    %v1845 = vmul.f32 %v1829, %v1761
    %v1846 = vmul.f32 %v1830, %v1771
    %v1847 = vmul.f32 %v1831, %v1781
    %v1848 = vmul.f32 %v1832, %v1791
    %v1849 = vmul.f32 %v1833, %v1801
    %vm1850 = vcmp.eq.s32.totalorder %v58, 0
    %vm1851 = vcmp.eq.s32.totalorder %v58, 1
    %vm1852 = vcmp.eq.s32.totalorder %v58, 2
    %vm1853 = vcmp.eq.s32.totalorder %v58, 3
    %vm1854 = vcmp.eq.s32.totalorder %v58, 4
    %vm1855 = vcmp.eq.s32.totalorder %v58, 5
    %vm1856 = vcmp.eq.s32.totalorder %v58, 6
    %vm1857 = vcmp.eq.s32.totalorder %v58, 7
    %vm1858 = vcmp.eq.s32.totalorder %v58, 8
    %vm1859 = vcmp.eq.s32.totalorder %v58, 9
    %vm1860 = vcmp.eq.s32.totalorder %v58, 10
    %vm1861 = vcmp.eq.s32.totalorder %v58, 11
    %vm1862 = vcmp.eq.s32.totalorder %v58, 12
    %vm1863 = vcmp.eq.s32.totalorder %v58, 13
    %vm1864 = vcmp.eq.s32.totalorder %v58, 14
    %vm1865 = vcmp.eq.s32.totalorder %v58, 15
    %v1866 = vsel %vm1850, 3.5741105, 0.012691027
    %v1867 = vsel %vm1851, 3.5741105, 0.012691027
    %v1868 = vsel %vm1852, 3.5741105, 0.012691027
    %v1869 = vsel %vm1853, 3.5741105, 0.012691027
    %v1870 = vsel %vm1854, 3.5741105, 0.012691027
    %v1871 = vsel %vm1855, 3.5741105, 0.012691027
    %v1872 = vsel %vm1856, 3.5741105, 0.012691027
    %v1873 = vsel %vm1857, 3.5741105, 0.012691027
    %v1874 = vsel %vm1858, 3.5741105, 0.012691027
    %v1875 = vsel %vm1859, 3.5741105, 0.012691027
    %v1876 = vsel %vm1860, 3.5741105, 0.012691027
    %v1877 = vsel %vm1861, 3.5741105, 0.012691027
    %v1878 = vsel %vm1862, 3.5741105, 0.012691027
    %v1879 = vsel %vm1863, 3.5741105, 0.012691027
    %v1880 = vsel %vm1864, 3.5741105, 0.012691027
    %v1881 = vsel %vm1865, 3.5741105, 0.012691027
    %v1882 = vsel %vm1850, 4.4, 0.04
    %v1883 = vsel %vm1851, 4.4, 0.04
    %v1884 = vsel %vm1852, 4.4, 0.04
    %v1885 = vsel %vm1853, 4.4, 0.04
    %v1886 = vsel %vm1854, 4.4, 0.04
    %v1887 = vsel %vm1855, 4.4, 0.04
    %v1888 = vsel %vm1856, 4.4, 0.04
    %v1889 = vsel %vm1857, 4.4, 0.04
    %v1890 = vsel %vm1858, 4.4, 0.04
    %v1891 = vsel %vm1859, 4.4, 0.04
    %v1892 = vsel %vm1860, 4.4, 0.04
    %v1893 = vsel %vm1861, 4.4, 0.04
    %v1894 = vsel %vm1862, 4.4, 0.04
    %v1895 = vsel %vm1863, 4.4, 0.04
    %v1896 = vsel %vm1864, 4.4, 0.04
    %v1897 = vsel %vm1865, 4.4, 0.04
    %v1898 = vmul.f32 %v1834, 0.8333333
    %v1899 = vmul.f32 %v1835, 0.8333333
    %v1900 = vmul.f32 %v1836, 0.8333333
    %v1901 = vmul.f32 %v1837, 0.8333333
    %v1902 = vmul.f32 %v1838, 0.8333333
    %v1903 = vmul.f32 %v1839, 0.8333333
    %v1904 = vmul.f32 %v1840, 0.8333333
    %v1905 = vmul.f32 %v1841, 0.8333333
    %v1906 = vmul.f32 %v1842, 0.8333333
    %v1907 = vmul.f32 %v1843, 0.8333333
    %v1908 = vmul.f32 %v1844, 0.8333333
    %v1909 = vmul.f32 %v1845, 0.8333333
    %v1910 = vmul.f32 %v1846, 0.8333333
    %v1911 = vmul.f32 %v1847, 0.8333333
    %v1912 = vmul.f32 %v1848, 0.8333333
    %v1913 = vmul.f32 %v1849, 0.8333333
    %v1914 = vsub.f32 %v1898, %v1882
    %v1915 = vsub.f32 %v1899, %v1883
    %v1916 = vsub.f32 %v1900, %v1884
    %v1917 = vsub.f32 %v1901, %v1885
    %v1918 = vsub.f32 %v1902, %v1886
    %v1919 = vsub.f32 %v1903, %v1887
    %v1920 = vsub.f32 %v1904, %v1888
    %v1921 = vsub.f32 %v1905, %v1889
    %v1922 = vsub.f32 %v1906, %v1890
    %v1923 = vsub.f32 %v1907, %v1891
    %v1924 = vsub.f32 %v1908, %v1892
    %v1925 = vsub.f32 %v1909, %v1893
    %v1926 = vsub.f32 %v1910, %v1894
    %v1927 = vsub.f32 %v1911, %v1895
    %v1928 = vsub.f32 %v1912, %v1896
    %v1929 = vsub.f32 %v1913, %v1897
    %v1930 = vmul.f32 %v1651, %v1914
    %v1931 = vmul.f32 %v1661, %v1915
    %v1932 = vmul.f32 %v1671, %v1916
    %v1933 = vmul.f32 %v1681, %v1917
    %v1934 = vmul.f32 %v1691, %v1918
    %v1935 = vmul.f32 %v1701, %v1919
    %v1936 = vmul.f32 %v1711, %v1920
    %v1937 = vmul.f32 %v1721, %v1921
    %v1938 = vmul.f32 %v1731, %v1922
    %v1939 = vmul.f32 %v1741, %v1923
    %v1940 = vmul.f32 %v1751, %v1924
    %v1941 = vmul.f32 %v1761, %v1925
    %v1942 = vmul.f32 %v1771, %v1926
    %v1943 = vmul.f32 %v1781, %v1927
    %v1944 = vmul.f32 %v1791, %v1928
    %v1945 = vmul.f32 %v1801, %v1929
    %v1946 = vadd.f32 %v1866, %v1930
    %v1947 = vadd.f32 %v1867, %v1931
    %v1948 = vadd.f32 %v1868, %v1932
    %v1949 = vadd.f32 %v1869, %v1933
    %v1950 = vadd.f32 %v1870, %v1934
    %v1951 = vadd.f32 %v1871, %v1935
    %v1952 = vadd.f32 %v1872, %v1936
    %v1953 = vadd.f32 %v1873, %v1937
    %v1954 = vadd.f32 %v1874, %v1938
    %v1955 = vadd.f32 %v1875, %v1939
    %v1956 = vadd.f32 %v1876, %v1940
    %v1957 = vadd.f32 %v1877, %v1941
    %v1958 = vadd.f32 %v1878, %v1942
    %v1959 = vadd.f32 %v1879, %v1943
    %v1960 = vadd.f32 %v1880, %v1944
    %v1961 = vadd.f32 %v1881, %v1945
    %v1962 = vadd.f32 %v1946, %v1947
    %v1963 = vadd.f32 %v1962, %v1948
    %v1964 = vadd.f32 %v1963, %v1949
    %v1965 = vadd.f32 %v1964, %v1950
    %v1966 = vadd.f32 %v1965, %v1951
    %v1967 = vadd.f32 %v1966, %v1952
    %v1968 = vadd.f32 %v1967, %v1953
    %v1969 = vadd.f32 %v1968, %v1954
    %v1970 = vadd.f32 %v1969, %v1955
    %v1971 = vadd.f32 %v1970, %v1956
    %v1972 = vadd.f32 %v1971, %v1957
    %v1973 = vadd.f32 %v1972, %v1958
    %v1974 = vadd.f32 %v1973, %v1959
    %v1975 = vadd.f32 %v1974, %v1960
    %v1976 = vadd.f32 %v1975, %v1961
    %v1977 = vlaneseq
    %v1978 = vshrl.u32 %v1977, 7
    %v1979 = vlaneseq
    %v1980 = vand.u32 %v1979, 127
    %s1981 = smul.u32 0, 1024
    %v1982 = vmul.u32 %v1978, 128
    %v1983 = vstv %s1981
    %v1984 = vadd.s32 %v1983, %v1982
    %v1985 = vadd.s32 %v1984, %v1980
    %vm1986 = vcmp.lt.s32.totalorder %v1985, 8
    %v1987 = vsel %vm1986, %v1976, 0.0
    %1988 = vadd.xlane.f32.xlu0 %v1987
    %v1989 = vpop.xlane.xlu0 %1988
    %v1990 = vrot.slane %v1989, 4
    %v1991 = vadd.f32 %v1989, %v1990
    %v1992 = vrot.slane %v1991, 2
    %v1993 = vadd.f32 %v1991, %v1992
    %v1994 = vrot.slane %v1993, 1
    %v1995 = vadd.f32 %v1993, %v1994
    %s1996 = vtos %v1995
    %s1997 = scalar_lea.smem [#allocation7], 0
    %1998 = sst [smem:[%s1997]] %s1996
    // Predicated region
    $region18: #{tpu_custom_call.1} parent=1 // pred_check
      _
    $region19: #{tpu_custom_call.1} parent=1 // pred_check_branch
      %2000 = sbr.rel (0) target = $region21
    $region20: #{tpu_custom_call.1} parent=1 // pred_region
      %2002 = vsyncadd [#allocation4], 0
      %s2004 = sshll.u32 %s2, 4
      %s2005 = int_to_ptr.hbm [resolvable:$true] %s2004
      %2007 = dma.smem_to_hbm [#allocation7], 16, %s2005, [#allocation4]
    $region21: #{tpu_custom_call.1} parent=1 // pred_fallthru
      _
    // Predicated region
    $region22: #{tpu_custom_call.1} parent=1 // pred_check
      _
    $region23: #{tpu_custom_call.1} parent=1 // pred_check_branch
      %2009 = sbr.rel (0) target = $region25
    $region24: #{tpu_custom_call.1} parent=1 // pred_region
      %2011 = dma.done [#allocation4], 16
    $region25: #{tpu_custom_call.1} parent=1 // pred_fallthru
      _
    %2012 = sfence
    %2013 = vsyncpa [#allocation3], 1
    %2014 = vsyncpa [#allocation6], 1
    %2015 = vsyncpa [#allocation4], 1

</llo_original>
